<compile_context>
chip_gen: v7x
topology: tpu7x:2x2x1
jax: 0.10.0
libtpu: 0.0.40
codegen_flags: <defaults>
</compile_context>

<pallas_src>
import jax
import jax.numpy as jnp
from jax.experimental import pallas as pl
from jax.experimental.pallas import tpu as pltpu

BIG_DELTA = 1e10  # matches torch's 10000000000.0 for the last sample interval
_LANE = 128


def _volrend_kernel(mask_ref, depth_ref, density_ref, feat_ref, out_ref):
    """One chunk of rays.

    mask_ref    : (P, P) bf16 constant, M[j, i] = 1 iff j < i (resident, DMA'd once)
    depth_ref   : (TR, P) f32 sample depths (points on lanes)
    density_ref : (TR, P) f32 densities
    feat_ref    : (3, TR, P) features, channel-major (bf16 or f32)
    out_ref     : (TR, 4) f32  -> columns [feat_r, feat_g, feat_b, depth]
    """
    depth = depth_ref[...]
    density = density_ref[...]
    TR, P = depth.shape

    # deltas[i] = depth[i+1] - depth[i]; last interval = 1e10 (torch semantics).
    # Padded point lanes (see wrapper) carry density == 0, so their deltas are
    # irrelevant; the last REAL sample's 1e10 delta comes from the depth padding.
    deltas = jnp.concatenate(
        [depth[:, 1:] - depth[:, :-1],
         jnp.full((TR, 1), BIG_DELTA, dtype=jnp.float32)],
        axis=-1)

    dd = density * deltas  # per-interval optical depth

    # Exclusive cumsum along points as MXU matmuls with the resident mask.
    # The 0/1 mask is exactly representable in bf16; splitting dd into hi/lo
    # bf16 parts gives ~f32 accuracy with two single-pass dots (vs HIGH's 3).
    mask = mask_ref[...]
    dd_hi = dd.astype(jnp.bfloat16)
    dd_lo = (dd - dd_hi.astype(jnp.float32)).astype(jnp.bfloat16)
    excl = (jnp.dot(dd_hi, mask, preferred_element_type=jnp.float32)
            + jnp.dot(dd_lo, mask, preferred_element_type=jnp.float32))

    # weights = trans * (1 - exp(-dd)).  The extra full-width exp rides the
    # otherwise-idle EUP slot; this avoids the cancellation-prone
    # trans_i - trans_{i+1} trick and its XLU roll.
    trans = jnp.exp(-excl)
    weights = trans * (1.0 - jnp.exp(-dd))

    # Aggregate 3 feature channels + depth via lane reductions; store each
    # (TR, 1) column directly (no cross-lane concat of the reduction results).
    for c in range(3):
        out_ref[:, c:c + 1] = jnp.sum(
            weights * feat_ref[c].astype(jnp.float32), axis=-1, keepdims=True)
    out_ref[:, 3:4] = jnp.sum(weights * depth, axis=-1, keepdims=True)


def _round_up(x, m):
    return (x + m - 1) // m * m


def _choose_chunk(n_rays, requested):
    """Rays per grid step.

    Multiple of 128 (bf16 feature tile is (16,128); 128 also keeps the (chunk,4)
    output block sublane-aligned) and capped at ~R/8 so the grid has >= 8 steps
    (v7x megacore needs >= 2 blocks; >= 8 gives the pipeline real overlap).
    """
    requested = max(_LANE, _round_up(int(requested), _LANE))
    by_steps = max(_LANE, _round_up(-(-int(n_rays) // 8), _LANE))
    return min(requested, by_steps)


def volume_render(depth_values, density, feature_cmajor, *,
                  chunk_size=4096, vmem_limit_bytes=None):
    """Volume-rendering weights + aggregation (VolumeRenderer.forward hot path).

    Args:
      depth_values  : (R, P) f32 sample depths per ray (sample_lengths[..., 0]).
      density       : (R, P) f32 densities from implicit_fn.
      feature_cmajor: (3, R, P) features, channel-major (no wrapper transpose of
        the largest input).  May be bfloat16; upcast to f32 inside the kernel.
      chunk_size    : requested rays per grid step (the PyTorch chunking loop
        becomes the grid); the effective chunk is capped so the grid has >= 8
        steps.  Generation guidance: v6e 2048-4096; v7x <= 4096 with
        vmem_limit_bytes <= ~48-56 MiB; v5e <= 1024-2048 unless
        vmem_limit_bytes is raised above the 16 MiB scoped default.
      vmem_limit_bytes: optional override forwarded to the Mosaic compiler.

    Returns {'feature': (R, 3) f32, 'depth': (R, 1) f32} — same semantics as the
    PyTorch module's per-ray outputs (chunks concatenated).
    """
    R, P = depth_values.shape
    assert density.shape == (R, P)
    assert feature_cmajor.shape == (3, R, P)

    # --- pad the point axis to a lane multiple (128) -------------------------
    # COUPLING: pad depth with (last + 1e10) and density with exact zeros, so
    # the last REAL sample keeps its 1e10 delta and pad lanes get zero weight.
    Pp = _round_up(P, _LANE)
    if Pp != P:
        pad_p = Pp - P
        depth_values = jnp.concatenate(
            [depth_values,
             depth_values[:, -1:] + jnp.full((R, pad_p), BIG_DELTA, depth_values.dtype)],
            axis=-1)
        density = jnp.pad(density, ((0, 0), (0, pad_p)))
        feature_cmajor = jnp.pad(feature_cmajor, ((0, 0), (0, 0), (0, pad_p)))

    # --- pad rays to a multiple of the chunk (handles ragged last chunk) -----
    chunk = _choose_chunk(R, chunk_size)
    Rp = _round_up(R, chunk)
    if Rp != R:
        pad_r = Rp - R
        depth_values = jnp.pad(depth_values, ((0, pad_r), (0, 0)), constant_values=1.0)
        density = jnp.pad(density, ((0, pad_r), (0, 0)))
        feature_cmajor = jnp.pad(feature_cmajor, ((0, 0), (0, pad_r), (0, 0)))

    num_chunks = Rp // chunk

    # Constant exclusive-cumsum mask M[j, i] = 1 iff j < i (exact in bf16;
    # built once in the wrapper, resident in VMEM across all grid steps).
    jrow = jnp.arange(Pp, dtype=jnp.int32)[:, None]
    icol = jnp.arange(Pp, dtype=jnp.int32)[None, :]
    mask = (jrow < icol).astype(jnp.bfloat16)

    fused = pl.pallas_call(
        _volrend_kernel,
        out_shape=jax.ShapeDtypeStruct((Rp, 4), jnp.float32),
        grid_spec=pltpu.PrefetchScalarGridSpec(
            num_scalar_prefetch=0,
            grid=(num_chunks,),
            in_specs=[
                pl.BlockSpec((Pp, Pp), lambda i: (0, 0)),            # cumsum mask
                pl.BlockSpec((chunk, Pp), lambda i: (i, 0)),         # depth_values
                pl.BlockSpec((chunk, Pp), lambda i: (i, 0)),         # density
                pl.BlockSpec((3, chunk, Pp), lambda i: (0, i, 0)),   # feature (C,R,P)
            ],
            out_specs=pl.BlockSpec((chunk, 4), lambda i: (i, 0)),
        ),
        compiler_params=pltpu.CompilerParams(
            dimension_semantics=("parallel",),   # ray-chunk axis -> megacore on v7x
            vmem_limit_bytes=vmem_limit_bytes),
    )(mask, depth_values, density, feature_cmajor)

    fused = fused[:R]
    return {"feature": fused[:, :3], "depth": fused[:, 3:4]}


def _reference(depth_values, density, feature_rp3):
    """Pure-JAX transcription of the PyTorch math for validation."""
    deltas = jnp.concatenate(
        [depth_values[:, 1:] - depth_values[:, :-1],
         BIG_DELTA * jnp.ones_like(depth_values[:, :1])], axis=-1)[..., None]
    d = density[..., None] * deltas
    trans = jnp.exp(-jnp.concatenate(
        [jnp.zeros_like(d[:, :1, :]), jnp.cumsum(d[:, :-1, :], axis=-2)], axis=-2))
    weights = (1.0 - jnp.exp(-d)) * trans
    feat = jnp.sum(weights * feature_rp3, axis=-2)
    dep = jnp.sum(weights * depth_values[..., None], axis=-2)
    return feat, dep


if __name__ == "__main__":
    # Synthetic "sampler + implicit_fn" outputs (the module has no learned params).
    # TODO(synk): sampler / implicit_fn themselves stay outside the kernel.
    R, P = 2048, 128      # rays, samples per ray (128 -> lane-aligned)
    CHUNK = 512           # effective chunk becomes 256 -> 8 grid steps here

    key = jax.random.PRNGKey(0)
    k1, k2, k3 = jax.random.split(key, 3)

    # sorted, increasing sample depths per ray (like sample_lengths[..., 0])
    near, far = 1.0, 4.0
    base = jnp.linspace(near, far, P, dtype=jnp.float32)[None, :]
    jitter = 0.01 * jax.random.uniform(k1, (R, P), dtype=jnp.float32)
    depth_values = (base + jitter).astype(jnp.float32)

    # non-negative density, bounded feature (like NeRF outputs); feature is
    # channel-major and bf16 (~30% less HBM traffic on this mem-bound kernel).
    density = jax.nn.softplus(jax.random.normal(k2, (R, P), dtype=jnp.float32))
    feature_cmajor = jax.nn.sigmoid(
        jax.random.normal(k3, (3, R, P), dtype=jnp.float32)).astype(jnp.bfloat16)

    out = volume_render(depth_values, density, feature_cmajor, chunk_size=CHUNK)
    jax.block_until_ready(out)

    # Reference uses the same bf16-rounded feature values, upcast to f32.
    feature_rp3 = jnp.transpose(feature_cmajor.astype(jnp.float32), (1, 2, 0))
    ref_feat, ref_depth = _reference(depth_values, density, feature_rp3)

    assert out["feature"].shape == (R, 3) and out["depth"].shape == (R, 1)
    assert jnp.allclose(out["feature"], ref_feat, rtol=2e-4, atol=2e-4)
    assert jnp.allclose(out["depth"], ref_depth, rtol=2e-4, atol=2e-4)

    print("KERNEL_OK")
</pallas_src>

<mosaic_0001>
module attributes {stable_mosaic.version = 11 : i64} {
  func.func @_volrend_kernel(%arg0: i32, %arg1: memref<128x128xbf16, #tpu.memory_space<vmem>>, %arg2: memref<256x128xf32, #tpu.memory_space<vmem>>, %arg3: memref<256x128xf32, #tpu.memory_space<vmem>>, %arg4: memref<3x256x128xbf16, #tpu.memory_space<vmem>>, %arg5: memref<256x4xf32, #tpu.memory_space<vmem>>) attributes {dimension_semantics = [#tpu.dimension_semantics<parallel>], iteration_bounds = array<i64: 8>, scalar_prefetch = 0 : i64, scratch_operands = 0 : i64, tpu.core_type = #tpu.core_type<tc>, window_params = [{pipeline_mode = #tpu.pipeline_mode<synchronous>, transform_indices = @transform_0, window_bounds = array<i64: 128, 128>}, {transform_indices = @transform_1, window_bounds = array<i64: 256, 128>}, {transform_indices = @transform_2, window_bounds = array<i64: 256, 128>}, {transform_indices = @transform_3, window_bounds = array<i64: 3, 256, 128>}, {transform_indices = @transform_4, window_bounds = array<i64: 256, 4>}]} {
    %c0 = arith.constant 0 : index
    %c0_0 = arith.constant 0 : index
    %0 = vector.load %arg2[%c0, %c0_0] : memref<256x128xf32, #tpu.memory_space<vmem>>, vector<256x128xf32>
    %c0_1 = arith.constant 0 : index
    %c0_2 = arith.constant 0 : index
    %1 = vector.load %arg3[%c0_1, %c0_2] : memref<256x128xf32, #tpu.memory_space<vmem>>, vector<256x128xf32>
    %2 = vector.extract_strided_slice %0 {offsets = [0, 1], sizes = [256, 127], strides = [1, 1]} : vector<256x128xf32> to vector<256x127xf32>
    %3 = vector.extract_strided_slice %0 {offsets = [0, 0], sizes = [256, 127], strides = [1, 1]} : vector<256x128xf32> to vector<256x127xf32>
    %4 = arith.subf %2, %3 : vector<256x127xf32>
    %cst = arith.constant 1.000000e+10 : f32
    %5 = vector.broadcast %cst : f32 to vector<256x1xf32>
    %6 = tpu.concatenate %4, %5 in 1 : vector<256x127xf32>, vector<256x1xf32> -> vector<256x128xf32>
    %7 = arith.mulf %1, %6 : vector<256x128xf32>
    %c0_3 = arith.constant 0 : index
    %c0_4 = arith.constant 0 : index
    %8 = vector.load %arg1[%c0_3, %c0_4] : memref<128x128xbf16, #tpu.memory_space<vmem>>, vector<128x128xbf16>
    %9 = arith.truncf %7 : vector<256x128xf32> to vector<256x128xbf16>
    %10 = arith.extf %9 : vector<256x128xbf16> to vector<256x128xf32>
    %11 = arith.subf %7, %10 : vector<256x128xf32>
    %12 = arith.truncf %11 : vector<256x128xf32> to vector<256x128xbf16>
    %cst_5 = arith.constant dense<0.000000e+00> : vector<256x128xf32>
    %13 = tpu.matmul %9, %8, %cst_5 {dimension_numbers = #tpu.dot_dimension_numbers<[1], [0], [0], [1], [0, 0, 1, 1], [], []>} : vector<256x128xbf16>, vector<128x128xbf16>, vector<256x128xf32> -> vector<256x128xf32>
    %cst_6 = arith.constant dense<0.000000e+00> : vector<256x128xf32>
    %14 = tpu.matmul %12, %8, %cst_6 {dimension_numbers = #tpu.dot_dimension_numbers<[1], [0], [0], [1], [0, 0, 1, 1], [], []>} : vector<256x128xbf16>, vector<128x128xbf16>, vector<256x128xf32> -> vector<256x128xf32>
    %15 = arith.addf %13, %14 : vector<256x128xf32>
    %cst_7 = arith.constant 0.000000e+00 : f32
    %16 = vector.broadcast %cst_7 : f32 to vector<256x128xf32>
    %17 = arith.subf %16, %15 : vector<256x128xf32>
    %18 = math.exp %17 : vector<256x128xf32>
    %cst_8 = arith.constant 0.000000e+00 : f32
    %19 = vector.broadcast %cst_8 : f32 to vector<256x128xf32>
    %20 = arith.subf %19, %7 : vector<256x128xf32>
    %21 = math.exp %20 : vector<256x128xf32>
    %cst_9 = arith.constant 1.000000e+00 : f32
    %22 = vector.broadcast %cst_9 : f32 to vector<256x128xf32>
    %23 = arith.subf %22, %21 : vector<256x128xf32>
    %24 = arith.mulf %18, %23 : vector<256x128xf32>
    %c0_10 = arith.constant 0 : index
    %c0_11 = arith.constant 0 : index
    %c0_12 = arith.constant 0 : index
    %25 = vector.load %arg4[%c0_10, %c0_11, %c0_12] : memref<3x256x128xbf16, #tpu.memory_space<vmem>>, vector<1x256x128xbf16>
    %26 = vector.shape_cast %25 : vector<1x256x128xbf16> to vector<256x128xbf16>
    %27 = arith.extf %26 : vector<256x128xbf16> to vector<256x128xf32>
    %28 = arith.mulf %24, %27 : vector<256x128xf32>
    %cst_13 = arith.constant dense<0.000000e+00> : vector<256xf32>
    %29 = vector.multi_reduction <add>, %28, %cst_13 [1] : vector<256x128xf32> to vector<256xf32>
    %30 = vector.shape_cast %29 : vector<256xf32> to vector<256x1xf32>
    %c0_14 = arith.constant 0 : index
    %c0_15 = arith.constant 0 : index
    %31 = vector.load %arg5[%c0_14, %c0_15] : memref<256x4xf32, #tpu.memory_space<vmem>>, vector<256x1xf32>
    tpu.vector_store %arg5[%c0_14, %c0_15], %30 {strides = array<i32>} : memref<256x4xf32, #tpu.memory_space<vmem>>, vector<256x1xf32>,
    %c1 = arith.constant 1 : index
    %c0_16 = arith.constant 0 : index
    %c0_17 = arith.constant 0 : index
    %32 = vector.load %arg4[%c1, %c0_16, %c0_17] : memref<3x256x128xbf16, #tpu.memory_space<vmem>>, vector<1x256x128xbf16>
    %33 = vector.shape_cast %32 : vector<1x256x128xbf16> to vector<256x128xbf16>
    %34 = arith.extf %33 : vector<256x128xbf16> to vector<256x128xf32>
    %35 = arith.mulf %24, %34 : vector<256x128xf32>
    %cst_18 = arith.constant dense<0.000000e+00> : vector<256xf32>
    %36 = vector.multi_reduction <add>, %35, %cst_18 [1] : vector<256x128xf32> to vector<256xf32>
    %37 = vector.shape_cast %36 : vector<256xf32> to vector<256x1xf32>
    %c0_19 = arith.constant 0 : index
    %c1_20 = arith.constant 1 : index
    %38 = vector.load %arg5[%c0_19, %c1_20] : memref<256x4xf32, #tpu.memory_space<vmem>>, vector<256x1xf32>
    tpu.vector_store %arg5[%c0_19, %c1_20], %37 {strides = array<i32>} : memref<256x4xf32, #tpu.memory_space<vmem>>, vector<256x1xf32>,
    %c2 = arith.constant 2 : index
    %c0_21 = arith.constant 0 : index
    %c0_22 = arith.constant 0 : index
    %39 = vector.load %arg4[%c2, %c0_21, %c0_22] : memref<3x256x128xbf16, #tpu.memory_space<vmem>>, vector<1x256x128xbf16>
    %40 = vector.shape_cast %39 : vector<1x256x128xbf16> to vector<256x128xbf16>
    %41 = arith.extf %40 : vector<256x128xbf16> to vector<256x128xf32>
    %42 = arith.mulf %24, %41 : vector<256x128xf32>
    %cst_23 = arith.constant dense<0.000000e+00> : vector<256xf32>
    %43 = vector.multi_reduction <add>, %42, %cst_23 [1] : vector<256x128xf32> to vector<256xf32>
    %44 = vector.shape_cast %43 : vector<256xf32> to vector<256x1xf32>
    %c0_24 = arith.constant 0 : index
    %c2_25 = arith.constant 2 : index
    %45 = vector.load %arg5[%c0_24, %c2_25] : memref<256x4xf32, #tpu.memory_space<vmem>>, vector<256x1xf32>
    tpu.vector_store %arg5[%c0_24, %c2_25], %44 {strides = array<i32>} : memref<256x4xf32, #tpu.memory_space<vmem>>, vector<256x1xf32>,
    %46 = arith.mulf %24, %0 : vector<256x128xf32>
    %cst_26 = arith.constant dense<0.000000e+00> : vector<256xf32>
    %47 = vector.multi_reduction <add>, %46, %cst_26 [1] : vector<256x128xf32> to vector<256xf32>
    %48 = vector.shape_cast %47 : vector<256xf32> to vector<256x1xf32>
    %c0_27 = arith.constant 0 : index
    %c3 = arith.constant 3 : index
    %49 = vector.load %arg5[%c0_27, %c3] : memref<256x4xf32, #tpu.memory_space<vmem>>, vector<256x1xf32>
    tpu.vector_store %arg5[%c0_27, %c3], %48 {strides = array<i32>} : memref<256x4xf32, #tpu.memory_space<vmem>>, vector<256x1xf32>,
    return
  }
  func.func @transform_0(%arg0: i32) -> (i32, i32) {
    %c0_i32 = arith.constant 0 : i32
    %c0_i32_0 = arith.constant 0 : i32
    %c0_i32_1 = arith.constant 0 : i32
    return %c0_i32, %c0_i32_0 : i32, i32
  }
  func.func @transform_1(%arg0: i32) -> (i32, i32) {
    %c0_i32 = arith.constant 0 : i32
    %c0_i32_0 = arith.constant 0 : i32
    return %arg0, %c0_i32 : i32, i32
  }
  func.func @transform_2(%arg0: i32) -> (i32, i32) {
    %c0_i32 = arith.constant 0 : i32
    %c0_i32_0 = arith.constant 0 : i32
    return %arg0, %c0_i32 : i32, i32
  }
  func.func @transform_3(%arg0: i32) -> (i32, i32, i32) {
    %c0_i32 = arith.constant 0 : i32
    %c0_i32_0 = arith.constant 0 : i32
    %c0_i32_1 = arith.constant 0 : i32
    return %c0_i32, %arg0, %c0_i32_0 : i32, i32, i32
  }
  func.func @transform_4(%arg0: i32) -> (i32, i32) {
    %c0_i32 = arith.constant 0 : i32
    %c0_i32_0 = arith.constant 0 : i32
    return %arg0, %c0_i32 : i32, i32
  }
}

</mosaic_0001>

<llo_original>
// kernel: tpu_custom_call.1
$region0: #{tpu_custom_call.1}
  #allocation0 [shape = 'u32[]', space=smem, size = 0x4, offset = 0x4, fixed_abs, tag = 'smem constant byte address 0x4 - core index']
  #allocation1 [shape = 'u32[144,128]{1,0:T(1,128)}', space=vmem, size = 0x12000, scoped, tag = 'internal scratch']
  #allocation9 [shape = 's32[]', space=sflag, size = 0x4, offset = 0, fixed_abs, tag = 'sflag constant byte address 0x0 - dummy sync flag']
  %s0 = inlined_call_operand.hbm [shape: bf16[128,128], index: 0, kind: input, shape index: {}]
  %s1 = inlined_call_operand.hbm [shape: f32[2048,128], index: 1, kind: input, shape index: {}]
  %s2 = inlined_call_operand.hbm [shape: f32[2048,128], index: 2, kind: input, shape index: {}]
  %s3 = inlined_call_operand.hbm [shape: bf16[3,2048,128], index: 3, kind: input, shape index: {}]
  %s4 = inlined_call_operand.vmem [shape: f32[2048,4], index: 4, kind: output, shape index: {}]
  %s5 = sld [smem:[#allocation0]]
  $region65: #{tpu_custom_call.1} parent=0
    _
  %s7 = ssub.s32 1, %s5
  %s8 = scalar_select 0, %s7, %s5
  $region1: #{tpu_custom_call.1} parent=0
    #allocation2 [shape = 'u8[32768]{0}', space=vmem, size = 0x8000, scoped, tag = 'input window, operand 0, single buffered']
    #allocation3 [shape = 's32[2]{0}', space=sflag, size = 0x8, scoped, tag = 'scoped memory for tpu_custom_call.1']
    #allocation4 [shape = 'u8[262144]{0}', space=vmem, size = 0x40000, scoped, tag = 'input window, operand 1']
    #allocation5 [shape = 's32[2]{0}', space=sflag, size = 0x8, scoped, tag = 'scoped memory for tpu_custom_call.1']
    #allocation6 [shape = 'u8[262144]{0}', space=vmem, size = 0x40000, scoped, tag = 'input window, operand 2']
    #allocation7 [shape = 'u8[393216]{0}', space=vmem, size = 0x60000, scoped, tag = 'input window, operand 3']
    #allocation8 [shape = 's32[2]{0}', space=sflag, size = 0x8, scoped, tag = 'scoped memory for tpu_custom_call.1']
    %9 = vsyncpa [#allocation3], 0
    %10 = vsyncpa [#allocation5], 0
    %s11 = scalar_lea.sflag [#allocation5], 1
    %12 = vsyncpa %s11, 0
    %13 = vsyncpa [#allocation8], 0
    %s14 = scalar_lea.sflag [#allocation8], 1
    %15 = vsyncpa %s14, 0
    loop: start=0, step=1, limit=10
    $region2: #{tpu_custom_call.1} parent=1 // loop_pre_header
      _
    $region3: #{tpu_custom_call.1} parent=1 // loop_header
      %s17 = sphi 0, %s21
      %p18 = scmp.ge.s32.totalorder %s17, 10
      %s25 = sphi 0, %s25
      %s27 = sphi 0, %s25
      %s28 = sphi 0, %s27
      %s42 = sphi 0, %s28
      %s48 = sphi 0, %s50
      %s51 = sphi 0, %s48
      %s52 = sphi 0, %s51
      %s68 = sphi 0, %s52
      %s74 = sphi 0, %s76
      %s77 = sphi 0, %s74
      %s78 = sphi 0, %s77
      %s94 = sphi 0, %s78
      %s100 = sphi 0, %s102
      %s103 = sphi 0, %s100
      %s104 = sphi 0, %s103
      %s120 = sphi 0, %s104
      %s126 = sphi 0, %s128
      %s129 = sphi 0, %s126
      %s130 = sphi 0, %s129
      %s146 = sphi 0, %s130
    $region4: #{tpu_custom_call.1} parent=1 // loop_header_branch
      %20 = sbr.rel (%p18) target = $region8
    $region5: #{tpu_custom_call.1} parent=1 // loop_body
      %s22 = ssub.s32 %s17, 1
      %s23 = ssub.s32 %s17, 2
      %s24 = sadd.s32 %s17, 1
      %s26 = sadd.s32 %s25, 1
      %p29 = scmp.eq.s32.totalorder %s17, 7
      %p30 = scmp.ne.s32.totalorder %s25, %s27
      %p31 = scmp.eq.s32.totalorder %s17, 0
      %p32 = por %p30, %p31
      %p33 = scmp.ne.s32.totalorder %s25, %s27
      %p34 = scmp.eq.s32.totalorder %s22, 7
      %p35 = por %p33, %p34
      %p36 = scmp.ne.s32.totalorder %s27, %s28
      %p37 = scmp.eq.s32.totalorder %s22, 0
      %p38 = por %p36, %p37
      %p39 = scmp.ne.s32.totalorder %s27, %s28
      %p40 = scmp.eq.s32.totalorder %s23, 7
      %p41 = por %p39, %p40
      %p43 = scmp.ne.s32.totalorder %s28, %s42
      %p44 = scmp.eq.s32.totalorder %s23, 0
      %p45 = por %p43, %p44
      %s46 = ssub.s32 %s17, %s24
      %p47 = scmp.eq.s32.totalorder %s46, 0
      %s49 = sadd.s32 %s48, 1
      %s50 = scalar_select %p47, %s48, %s49
      %p53 = pneg %p47
      %p54 = scmp.eq.s32.totalorder %s17, 7
      %p55 = por %p53, %p54
      %p56 = scmp.ne.s32.totalorder %s48, %s51
      %p57 = scmp.eq.s32.totalorder %s17, 0
      %p58 = por %p56, %p57
      %p59 = scmp.ne.s32.totalorder %s48, %s51
      %p60 = scmp.eq.s32.totalorder %s22, 7
      %p61 = por %p59, %p60
      %p62 = scmp.ne.s32.totalorder %s51, %s52
      %p63 = scmp.eq.s32.totalorder %s22, 0
      %p64 = por %p62, %p63
      %p65 = scmp.ne.s32.totalorder %s51, %s52
      %p66 = scmp.eq.s32.totalorder %s23, 7
      %p67 = por %p65, %p66
      %p69 = scmp.ne.s32.totalorder %s52, %s68
      %p70 = scmp.eq.s32.totalorder %s23, 0
      %p71 = por %p69, %p70
      %s72 = ssub.s32 %s17, %s24
      %p73 = scmp.eq.s32.totalorder %s72, 0
      %s75 = sadd.s32 %s74, 1
      %s76 = scalar_select %p73, %s74, %s75
      %p79 = pneg %p73
      %p80 = scmp.eq.s32.totalorder %s17, 7
      %p81 = por %p79, %p80
      %p82 = scmp.ne.s32.totalorder %s74, %s77
      %p83 = scmp.eq.s32.totalorder %s17, 0
      %p84 = por %p82, %p83
      %p85 = scmp.ne.s32.totalorder %s74, %s77
      %p86 = scmp.eq.s32.totalorder %s22, 7
      %p87 = por %p85, %p86
      %p88 = scmp.ne.s32.totalorder %s77, %s78
      %p89 = scmp.eq.s32.totalorder %s22, 0
      %p90 = por %p88, %p89
      %p91 = scmp.ne.s32.totalorder %s77, %s78
      %p92 = scmp.eq.s32.totalorder %s23, 7
      %p93 = por %p91, %p92
      %p95 = scmp.ne.s32.totalorder %s78, %s94
      %p96 = scmp.eq.s32.totalorder %s23, 0
      %p97 = por %p95, %p96
      %s98 = ssub.s32 %s17, %s24
      %p99 = scmp.eq.s32.totalorder %s98, 0
      %s101 = sadd.s32 %s100, 1
      %s102 = scalar_select %p99, %s100, %s101
      %p105 = pneg %p99
      %p106 = scmp.eq.s32.totalorder %s17, 7
      %p107 = por %p105, %p106
      %p108 = scmp.ne.s32.totalorder %s100, %s103
      %p109 = scmp.eq.s32.totalorder %s17, 0
      %p110 = por %p108, %p109
      %p111 = scmp.ne.s32.totalorder %s100, %s103
      %p112 = scmp.eq.s32.totalorder %s22, 7
      %p113 = por %p111, %p112
      %p114 = scmp.ne.s32.totalorder %s103, %s104
      %p115 = scmp.eq.s32.totalorder %s22, 0
      %p116 = por %p114, %p115
      %p117 = scmp.ne.s32.totalorder %s103, %s104
      %p118 = scmp.eq.s32.totalorder %s23, 7
      %p119 = por %p117, %p118
      %p121 = scmp.ne.s32.totalorder %s104, %s120
      %p122 = scmp.eq.s32.totalorder %s23, 0
      %p123 = por %p121, %p122
      %s124 = ssub.s32 %s17, %s24
      %p125 = scmp.eq.s32.totalorder %s124, 0
      %s127 = sadd.s32 %s126, 1
      %s128 = scalar_select %p125, %s126, %s127
      %p131 = pneg %p125
      %p132 = scmp.eq.s32.totalorder %s17, 7
      %p133 = por %p131, %p132
      %p134 = scmp.ne.s32.totalorder %s126, %s129
      %p135 = scmp.eq.s32.totalorder %s17, 0
      %p136 = por %p134, %p135
      %p137 = scmp.ne.s32.totalorder %s126, %s129
      %p138 = scmp.eq.s32.totalorder %s22, 7
      %p139 = por %p137, %p138
      %p140 = scmp.ne.s32.totalorder %s129, %s130
      %p141 = scmp.eq.s32.totalorder %s22, 0
      %p142 = por %p140, %p141
      %p143 = scmp.ne.s32.totalorder %s129, %s130
      %p144 = scmp.eq.s32.totalorder %s23, 7
      %p145 = por %p143, %p144
      %p147 = scmp.ne.s32.totalorder %s130, %s146
      %p148 = scmp.eq.s32.totalorder %s23, 0
      %p149 = por %p147, %p148
      %p150 = scmp.le.s32.totalorder 1, %s17
      %p151 = scmp.lt.s32.totalorder %s17, 9
      %p152 = pnand %p150, %p151
      %p153 = pneg %p152
      // Predicated region
      $region9: #{tpu_custom_call.1} parent=5 // pred_check
        _
      $region10: #{tpu_custom_call.1} parent=5 // pred_check_branch
        %155 = sbr.rel (%p152) target = $region12
      $region11: #{tpu_custom_call.1} parent=5 // pred_region
        %s156 = ssub.s32 %s17, 1
        // Predicated region
        $region13: #{tpu_custom_call.1} parent=11 // pred_check
          %p157 = pneg %p38
        $region14: #{tpu_custom_call.1} parent=11 // pred_check_branch
          %159 = sbr.rel (%p157) target = $region16
        $region15: #{tpu_custom_call.1} parent=11 // pred_region
          %s161 = ssub.s32 1024, 1024
          %162 = vsyncadd [#allocation3], %s161
          %s163 = sshll.u32 [#allocation2], 4
          %s164 = int_to_ptr.vmem [resolvable:$true] %s163
          %169 = dma.hbm_to_vmem [thread:$0]  %s0, 1024, %s164, [#allocation3], 64, 64, 4
        $region16: #{tpu_custom_call.1} parent=11 // pred_fallthru
          _
      $region12: #{tpu_custom_call.1} parent=5 // pred_fallthru
        _
      %p170 = scmp.lt.s32.totalorder %s17, 8
      // Predicated region
      $region17: #{tpu_custom_call.1} parent=5 // pred_check
        %p171 = pneg %p170
      $region18: #{tpu_custom_call.1} parent=5 // pred_check_branch
        %173 = sbr.rel (%p171) target = $region20
      $region19: #{tpu_custom_call.1} parent=5 // pred_region
        // Predicated region
        $region21: #{tpu_custom_call.1} parent=19 // pred_check
          %p174 = pneg %p58
        $region22: #{tpu_custom_call.1} parent=19 // pred_check_branch
          %176 = sbr.rel (%p174) target = $region24
        $region23: #{tpu_custom_call.1} parent=19 // pred_region
          %s177 = sand.u32 %s17, 1
          %s178 = scalar_lea.sflag [#allocation5], %s177
          %s179 = sand.u32 %s48, 1
          %s180 = smul.addr %s179, 256
          %s181 = scalar_lea.vmem [#allocation4], %s180
          %s182 = smul.u32 32, %s17
          %s184 = ssub.s32 4096, 4096
          %185 = vsyncadd %s178, %s184
          %s186 = smul.addr %s182, 128
          %s187 = scalar_lea.hbm %s1, %s186
          %s188 = sshll.u32 %s181, 4
          %s189 = int_to_ptr.vmem [resolvable:$true] %s188
          %194 = dma.hbm_to_vmem [thread:$0]  %s187, 4096, %s189, %s178, 128, 128, 8
        $region24: #{tpu_custom_call.1} parent=19 // pred_fallthru
          _
        // Predicated region
        $region25: #{tpu_custom_call.1} parent=19 // pred_check
          %p195 = pneg %p84
        $region26: #{tpu_custom_call.1} parent=19 // pred_check_branch
          %197 = sbr.rel (%p195) target = $region28
        $region27: #{tpu_custom_call.1} parent=19 // pred_region
          %s198 = sand.u32 %s17, 1
          %s199 = scalar_lea.sflag [#allocation5], %s198
          %s200 = sand.u32 %s74, 1
          %s201 = smul.addr %s200, 256
          %s202 = scalar_lea.vmem [#allocation6], %s201
          %s203 = smul.u32 32, %s17
          %s205 = ssub.s32 4096, 4096
          %206 = vsyncadd %s199, %s205
          %s207 = smul.addr %s203, 128
          %s208 = scalar_lea.hbm %s2, %s207
          %s209 = sshll.u32 %s202, 4
          %s210 = int_to_ptr.vmem [resolvable:$true] %s209
          %215 = dma.hbm_to_vmem [thread:$0]  %s208, 4096, %s210, %s199, 128, 128, 8
        $region28: #{tpu_custom_call.1} parent=19 // pred_fallthru
          _
        // Predicated region
        $region29: #{tpu_custom_call.1} parent=19 // pred_check
          %p216 = pneg %p110
        $region30: #{tpu_custom_call.1} parent=19 // pred_check_branch
          %218 = sbr.rel (%p216) target = $region32
        $region31: #{tpu_custom_call.1} parent=19 // pred_region
          #allocation10 [shape = 'u32[6]{0}', space=smem, size = 0x18, scoped, tag = 'DMA stride descriptor']
          %s219 = sand.u32 %s100, 1
          %s220 = scalar_lea.sflag [#allocation8], %s219
          %s221 = sand.u32 %s100, 1
          %s222 = smul.addr %s221, 384
          %s223 = scalar_lea.vmem [#allocation7], %s222
          %s224 = smul.u32 32, %s17
          %s226 = ssub.s32 6144, 6144
          %227 = vsyncadd %s220, %s226
          %s228 = smul.addr %s224, 64
          %s229 = scalar_lea.hbm %s3, %s228
          %s231 = sshll.u32 1, 14
          %s232 = sxor.u32 4294967295, %s231
          %s234 = sld [smem:[#allocation0]]
          %s235 = sadd.s32 2, %s234
          %s237 = sshll.u32 7, 26
          %s238 = sxor.u32 4294967295, %s237
          %s239 = sand.u32 0, %s238
          %s240 = sshll.u32 %s235, 26
          %s241 = sor.u32 %s239, %s240
          %s242 = sshll.u32 %s223, 4
          %s243 = int_to_ptr.vmem [resolvable:$true] %s242
          %249 = sst [smem:[#allocation10]] 16384
          %s250 = scalar_lea.smem [#allocation10], 1
          %251 = sst [smem:[%s250]] 2048
          %s252 = scalar_lea.smem [#allocation10], 2
          %253 = sst [smem:[%s252]] 32
          %s254 = scalar_lea.smem [#allocation10], 3
          %255 = sst [smem:[%s254]] 64
          %s256 = scalar_lea.smem [#allocation10], 4
          %257 = sst [smem:[%s256]] 64
          %s258 = scalar_lea.smem [#allocation10], 5
          %259 = sst [smem:[%s258]] 4
          %261 = dma.general %s229, 6144, %s243, %s220, [#allocation9], [#allocation10], %s241, 0
        $region32: #{tpu_custom_call.1} parent=19 // pred_fallthru
          _
      $region20: #{tpu_custom_call.1} parent=5 // pred_fallthru
        _
      %p262 = scmp.le.s32.totalorder 1, %s17
      %p263 = scmp.lt.s32.totalorder %s17, 9
      %p264 = pnand %p262, %p263
      %p265 = pneg %p264
      // Predicated region
      $region33: #{tpu_custom_call.1} parent=5 // pred_check
        _
      $region34: #{tpu_custom_call.1} parent=5 // pred_check_branch
        %267 = sbr.rel (%p264) target = $region36
      $region35: #{tpu_custom_call.1} parent=5 // pred_region
        %s268 = ssub.s32 %s17, 1
        // Predicated region
        $region37: #{tpu_custom_call.1} parent=35 // pred_check
          %p269 = pneg %p38
        $region38: #{tpu_custom_call.1} parent=35 // pred_check_branch
          %271 = sbr.rel (%p269) target = $region40
        $region39: #{tpu_custom_call.1} parent=35 // pred_region
          %272 = dma.done [#allocation3], 1024
        $region40: #{tpu_custom_call.1} parent=35 // pred_fallthru
          _
        %s273 = sand.u32 %s22, 1
        %s274 = scalar_lea.sflag [#allocation5], %s273
        %s275 = sand.u32 %s51, 1
        %s276 = smul.addr %s275, 256
        %s277 = scalar_lea.vmem [#allocation4], %s276
        // Predicated region
        $region41: #{tpu_custom_call.1} parent=35 // pred_check
          %p278 = pneg %p64
        $region42: #{tpu_custom_call.1} parent=35 // pred_check_branch
          %280 = sbr.rel (%p278) target = $region44
        $region43: #{tpu_custom_call.1} parent=35 // pred_region
          %281 = dma.done %s274, 4096
        $region44: #{tpu_custom_call.1} parent=35 // pred_fallthru
          _
        %s282 = sand.u32 %s22, 1
        %s283 = scalar_lea.sflag [#allocation5], %s282
        %s284 = sand.u32 %s77, 1
        %s285 = smul.addr %s284, 256
        %s286 = scalar_lea.vmem [#allocation6], %s285
        // Predicated region
        $region45: #{tpu_custom_call.1} parent=35 // pred_check
          %p287 = pneg %p90
        $region46: #{tpu_custom_call.1} parent=35 // pred_check_branch
          %289 = sbr.rel (%p287) target = $region48
        $region47: #{tpu_custom_call.1} parent=35 // pred_region
          %290 = dma.done %s283, 4096
        $region48: #{tpu_custom_call.1} parent=35 // pred_fallthru
          _
        %s291 = sand.u32 %s103, 1
        %s292 = scalar_lea.sflag [#allocation8], %s291
        %s293 = sand.u32 %s103, 1
        %s294 = smul.addr %s293, 384
        %s295 = scalar_lea.vmem [#allocation7], %s294
        // Predicated region
        $region49: #{tpu_custom_call.1} parent=35 // pred_check
          %p296 = pneg %p116
        $region50: #{tpu_custom_call.1} parent=35 // pred_check_branch
          %298 = sbr.rel (%p296) target = $region52
        $region51: #{tpu_custom_call.1} parent=35 // pred_region
          %299 = dma.done %s292, 6144
        $region52: #{tpu_custom_call.1} parent=35 // pred_fallthru
          _
        %p300 = pneg %p38
        %p301 = pneg %p35
        %s302 = sand.u32 %s22, 1
        %s303 = scalar_lea.sflag [#allocation5], %s302
        %s304 = sand.u32 %s51, 1
        %s305 = smul.addr %s304, 256
        %s306 = scalar_lea.vmem [#allocation4], %s305
        %p307 = pneg %p64
        %p308 = pneg %p61
        %s309 = sand.u32 %s22, 1
        %s310 = scalar_lea.sflag [#allocation5], %s309
        %s311 = sand.u32 %s77, 1
        %s312 = smul.addr %s311, 256
        %s313 = scalar_lea.vmem [#allocation6], %s312
        %p314 = pneg %p90
        %p315 = pneg %p87
        %s316 = sand.u32 %s103, 1
        %s317 = scalar_lea.sflag [#allocation8], %s316
        %s318 = sand.u32 %s103, 1
        %s319 = smul.addr %s318, 384
        %s320 = scalar_lea.vmem [#allocation7], %s319
        %p321 = pneg %p116
        %p322 = pneg %p113
        %p323 = pneg %p142
        %p324 = pneg %p139
        %s325 = smul.u32 32, %s22
        %p326 = scmp.lt.s32.totalorder %s325, 255
        %s327 = scalar_select %p326, %s325, 255
        %s328 = smul.addr %s327, 8
        %s329 = scalar_lea.vmem %s4, %s328
        %s330 = smul.u32 32, %s22
        %s331 = smul.u32 32, %s22
        %s332 = smul.u32 32, %s22
        %s333 = smul.u32 32, %s22
        %p334 = scmp.lt.s32.totalorder %s333, 255
        %s335 = scalar_select %p334, %s333, 255
        %s336 = smul.addr %s335, 8
        %s337 = scalar_lea.vmem %s4, %s336
        %s338 = smul.u32 32, %s22
        %v340 = vld [vmem:[%s277] sm:$0xff]
        %v341 = vld [vmem:[%s277 + $0x8] sm:$0xff]
        %v342 = vld [vmem:[%s277 + $0x10] sm:$0xff]
        %v343 = vld [vmem:[%s277 + $0x18] sm:$0xff]
        %v344 = vld [vmem:[%s277 + $0x20] sm:$0xff]
        %v345 = vld [vmem:[%s277 + $0x28] sm:$0xff]
        %v346 = vld [vmem:[%s277 + $0x30] sm:$0xff]
        %v347 = vld [vmem:[%s277 + $0x38] sm:$0xff]
        %v348 = vld [vmem:[%s277 + $0x40] sm:$0xff]
        %v349 = vld [vmem:[%s277 + $0x48] sm:$0xff]
        %v350 = vld [vmem:[%s277 + $0x50] sm:$0xff]
        %v351 = vld [vmem:[%s277 + $0x58] sm:$0xff]
        %v352 = vld [vmem:[%s277 + $0x60] sm:$0xff]
        %v353 = vld [vmem:[%s277 + $0x68] sm:$0xff]
        %v354 = vld [vmem:[%s277 + $0x70] sm:$0xff]
        %v355 = vld [vmem:[%s277 + $0x78] sm:$0xff]
        %v356 = vld [vmem:[%s277 + $0x80] sm:$0xff]
        %v357 = vld [vmem:[%s277 + $0x88] sm:$0xff]
        %v358 = vld [vmem:[%s277 + $0x90] sm:$0xff]
        %v359 = vld [vmem:[%s277 + $0x98] sm:$0xff]
        %v360 = vld [vmem:[%s277 + $0xa0] sm:$0xff]
        %v361 = vld [vmem:[%s277 + $0xa8] sm:$0xff]
        %v362 = vld [vmem:[%s277 + $0xb0] sm:$0xff]
        %v363 = vld [vmem:[%s277 + $0xb8] sm:$0xff]
        %v364 = vld [vmem:[%s277 + $0xc0] sm:$0xff]
        %v365 = vld [vmem:[%s277 + $0xc8] sm:$0xff]
        %v366 = vld [vmem:[%s277 + $0xd0] sm:$0xff]
        %v367 = vld [vmem:[%s277 + $0xd8] sm:$0xff]
        %v368 = vld [vmem:[%s277 + $0xe0] sm:$0xff]
        %v369 = vld [vmem:[%s277 + $0xe8] sm:$0xff]
        %v370 = vld [vmem:[%s277 + $0xf0] sm:$0xff]
        %v371 = vld [vmem:[%s277 + $0xf8] sm:$0xff]
        %v372 = vld [vmem:[%s286] sm:$0xff]
        %v373 = vld [vmem:[%s286 + $0x8] sm:$0xff]
        %v374 = vld [vmem:[%s286 + $0x10] sm:$0xff]
        %v375 = vld [vmem:[%s286 + $0x18] sm:$0xff]
        %v376 = vld [vmem:[%s286 + $0x20] sm:$0xff]
        %v377 = vld [vmem:[%s286 + $0x28] sm:$0xff]
        %v378 = vld [vmem:[%s286 + $0x30] sm:$0xff]
        %v379 = vld [vmem:[%s286 + $0x38] sm:$0xff]
        %v380 = vld [vmem:[%s286 + $0x40] sm:$0xff]
        %v381 = vld [vmem:[%s286 + $0x48] sm:$0xff]
        %v382 = vld [vmem:[%s286 + $0x50] sm:$0xff]
        %v383 = vld [vmem:[%s286 + $0x58] sm:$0xff]
        %v384 = vld [vmem:[%s286 + $0x60] sm:$0xff]
        %v385 = vld [vmem:[%s286 + $0x68] sm:$0xff]
        %v386 = vld [vmem:[%s286 + $0x70] sm:$0xff]
        %v387 = vld [vmem:[%s286 + $0x78] sm:$0xff]
        %v388 = vld [vmem:[%s286 + $0x80] sm:$0xff]
        %v389 = vld [vmem:[%s286 + $0x88] sm:$0xff]
        %v390 = vld [vmem:[%s286 + $0x90] sm:$0xff]
        %v391 = vld [vmem:[%s286 + $0x98] sm:$0xff]
        %v392 = vld [vmem:[%s286 + $0xa0] sm:$0xff]
        %v393 = vld [vmem:[%s286 + $0xa8] sm:$0xff]
        %v394 = vld [vmem:[%s286 + $0xb0] sm:$0xff]
        %v395 = vld [vmem:[%s286 + $0xb8] sm:$0xff]
        %v396 = vld [vmem:[%s286 + $0xc0] sm:$0xff]
        %v397 = vld [vmem:[%s286 + $0xc8] sm:$0xff]
        %v398 = vld [vmem:[%s286 + $0xd0] sm:$0xff]
        %v399 = vld [vmem:[%s286 + $0xd8] sm:$0xff]
        %v400 = vld [vmem:[%s286 + $0xe0] sm:$0xff]
        %v401 = vld [vmem:[%s286 + $0xe8] sm:$0xff]
        %v402 = vld [vmem:[%s286 + $0xf0] sm:$0xff]
        %v403 = vld [vmem:[%s286 + $0xf8] sm:$0xff]
        %436 = vrot.lane.b32.xlu0 %v340, 1
        %v437 = vpop.permute.xlu0 %436
        %438 = vrot.lane.b32.xlu0 %v341, 1
        %v439 = vpop.permute.xlu0 %438
        %440 = vrot.lane.b32.xlu0 %v342, 1
        %v441 = vpop.permute.xlu0 %440
        %442 = vrot.lane.b32.xlu0 %v343, 1
        %v443 = vpop.permute.xlu0 %442
        %444 = vrot.lane.b32.xlu0 %v344, 1
        %v445 = vpop.permute.xlu0 %444
        %446 = vrot.lane.b32.xlu0 %v345, 1
        %v447 = vpop.permute.xlu0 %446
        %448 = vrot.lane.b32.xlu0 %v346, 1
        %v449 = vpop.permute.xlu0 %448
        %450 = vrot.lane.b32.xlu0 %v347, 1
        %v451 = vpop.permute.xlu0 %450
        %452 = vrot.lane.b32.xlu0 %v348, 1
        %v453 = vpop.permute.xlu0 %452
        %454 = vrot.lane.b32.xlu0 %v349, 1
        %v455 = vpop.permute.xlu0 %454
        %456 = vrot.lane.b32.xlu0 %v350, 1
        %v457 = vpop.permute.xlu0 %456
        %458 = vrot.lane.b32.xlu0 %v351, 1
        %v459 = vpop.permute.xlu0 %458
        %460 = vrot.lane.b32.xlu0 %v352, 1
        %v461 = vpop.permute.xlu0 %460
        %462 = vrot.lane.b32.xlu0 %v353, 1
        %v463 = vpop.permute.xlu0 %462
        %464 = vrot.lane.b32.xlu0 %v354, 1
        %v465 = vpop.permute.xlu0 %464
        %466 = vrot.lane.b32.xlu0 %v355, 1
        %v467 = vpop.permute.xlu0 %466
        %468 = vrot.lane.b32.xlu0 %v356, 1
        %v469 = vpop.permute.xlu0 %468
        %470 = vrot.lane.b32.xlu0 %v357, 1
        %v471 = vpop.permute.xlu0 %470
        %472 = vrot.lane.b32.xlu0 %v358, 1
        %v473 = vpop.permute.xlu0 %472
        %474 = vrot.lane.b32.xlu0 %v359, 1
        %v475 = vpop.permute.xlu0 %474
        %476 = vrot.lane.b32.xlu0 %v360, 1
        %v477 = vpop.permute.xlu0 %476
        %478 = vrot.lane.b32.xlu0 %v361, 1
        %v479 = vpop.permute.xlu0 %478
        %480 = vrot.lane.b32.xlu0 %v362, 1
        %v481 = vpop.permute.xlu0 %480
        %482 = vrot.lane.b32.xlu0 %v363, 1
        %v483 = vpop.permute.xlu0 %482
        %484 = vrot.lane.b32.xlu0 %v364, 1
        %v485 = vpop.permute.xlu0 %484
        %486 = vrot.lane.b32.xlu0 %v365, 1
        %v487 = vpop.permute.xlu0 %486
        %488 = vrot.lane.b32.xlu0 %v366, 1
        %v489 = vpop.permute.xlu0 %488
        %490 = vrot.lane.b32.xlu0 %v367, 1
        %v491 = vpop.permute.xlu0 %490
        %492 = vrot.lane.b32.xlu0 %v368, 1
        %v493 = vpop.permute.xlu0 %492
        %494 = vrot.lane.b32.xlu0 %v369, 1
        %v495 = vpop.permute.xlu0 %494
        %496 = vrot.lane.b32.xlu0 %v370, 1
        %v497 = vpop.permute.xlu0 %496
        %498 = vrot.lane.b32.xlu0 %v371, 1
        %v499 = vpop.permute.xlu0 %498
        %v532 = vsub.f32 %v340, %v437
        %v533 = vsub.f32 %v341, %v439
        %v534 = vsub.f32 %v342, %v441
        %v535 = vsub.f32 %v343, %v443
        %v536 = vsub.f32 %v344, %v445
        %v537 = vsub.f32 %v345, %v447
        %v538 = vsub.f32 %v346, %v449
        %v539 = vsub.f32 %v347, %v451
        %v540 = vsub.f32 %v348, %v453
        %v541 = vsub.f32 %v349, %v455
        %v542 = vsub.f32 %v350, %v457
        %v543 = vsub.f32 %v351, %v459
        %v544 = vsub.f32 %v352, %v461
        %v545 = vsub.f32 %v353, %v463
        %v546 = vsub.f32 %v354, %v465
        %v547 = vsub.f32 %v355, %v467
        %v548 = vsub.f32 %v356, %v469
        %v549 = vsub.f32 %v357, %v471
        %v550 = vsub.f32 %v358, %v473
        %v551 = vsub.f32 %v359, %v475
        %v552 = vsub.f32 %v360, %v477
        %v553 = vsub.f32 %v361, %v479
        %v554 = vsub.f32 %v362, %v481
        %v555 = vsub.f32 %v363, %v483
        %v556 = vsub.f32 %v364, %v485
        %v557 = vsub.f32 %v365, %v487
        %v558 = vsub.f32 %v366, %v489
        %v559 = vsub.f32 %v367, %v491
        %v560 = vsub.f32 %v368, %v493
        %v561 = vsub.f32 %v369, %v495
        %v562 = vsub.f32 %v370, %v497
        %v563 = vsub.f32 %v371, %v499
        %596 = vrot.lane.b32.xlu0 %v532, 127
        %v597 = vpop.permute.xlu0 %596
        %598 = vrot.lane.b32.xlu0 %v533, 127
        %v599 = vpop.permute.xlu0 %598
        %600 = vrot.lane.b32.xlu0 %v534, 127
        %v601 = vpop.permute.xlu0 %600
        %602 = vrot.lane.b32.xlu0 %v535, 127
        %v603 = vpop.permute.xlu0 %602
        %604 = vrot.lane.b32.xlu0 %v536, 127
        %v605 = vpop.permute.xlu0 %604
        %606 = vrot.lane.b32.xlu0 %v537, 127
        %v607 = vpop.permute.xlu0 %606
        %608 = vrot.lane.b32.xlu0 %v538, 127
        %v609 = vpop.permute.xlu0 %608
        %610 = vrot.lane.b32.xlu0 %v539, 127
        %v611 = vpop.permute.xlu0 %610
        %612 = vrot.lane.b32.xlu0 %v540, 127
        %v613 = vpop.permute.xlu0 %612
        %614 = vrot.lane.b32.xlu0 %v541, 127
        %v615 = vpop.permute.xlu0 %614
        %616 = vrot.lane.b32.xlu0 %v542, 127
        %v617 = vpop.permute.xlu0 %616
        %618 = vrot.lane.b32.xlu0 %v543, 127
        %v619 = vpop.permute.xlu0 %618
        %620 = vrot.lane.b32.xlu0 %v544, 127
        %v621 = vpop.permute.xlu0 %620
        %622 = vrot.lane.b32.xlu0 %v545, 127
        %v623 = vpop.permute.xlu0 %622
        %624 = vrot.lane.b32.xlu0 %v546, 127
        %v625 = vpop.permute.xlu0 %624
        %626 = vrot.lane.b32.xlu0 %v547, 127
        %v627 = vpop.permute.xlu0 %626
        %628 = vrot.lane.b32.xlu0 %v548, 127
        %v629 = vpop.permute.xlu0 %628
        %630 = vrot.lane.b32.xlu0 %v549, 127
        %v631 = vpop.permute.xlu0 %630
        %632 = vrot.lane.b32.xlu0 %v550, 127
        %v633 = vpop.permute.xlu0 %632
        %634 = vrot.lane.b32.xlu0 %v551, 127
        %v635 = vpop.permute.xlu0 %634
        %636 = vrot.lane.b32.xlu0 %v552, 127
        %v637 = vpop.permute.xlu0 %636
        %638 = vrot.lane.b32.xlu0 %v553, 127
        %v639 = vpop.permute.xlu0 %638
        %640 = vrot.lane.b32.xlu0 %v554, 127
        %v641 = vpop.permute.xlu0 %640
        %642 = vrot.lane.b32.xlu0 %v555, 127
        %v643 = vpop.permute.xlu0 %642
        %644 = vrot.lane.b32.xlu0 %v556, 127
        %v645 = vpop.permute.xlu0 %644
        %646 = vrot.lane.b32.xlu0 %v557, 127
        %v647 = vpop.permute.xlu0 %646
        %648 = vrot.lane.b32.xlu0 %v558, 127
        %v649 = vpop.permute.xlu0 %648
        %650 = vrot.lane.b32.xlu0 %v559, 127
        %v651 = vpop.permute.xlu0 %650
        %652 = vrot.lane.b32.xlu0 %v560, 127
        %v653 = vpop.permute.xlu0 %652
        %654 = vrot.lane.b32.xlu0 %v561, 127
        %v655 = vpop.permute.xlu0 %654
        %656 = vrot.lane.b32.xlu0 %v562, 127
        %v657 = vpop.permute.xlu0 %656
        %658 = vrot.lane.b32.xlu0 %v563, 127
        %v659 = vpop.permute.xlu0 %658
        %vm692 = vcmask 1039360
        %v693 = vsel %vm692, %v597, 1e+10
        %v694 = vsel %vm692, %v599, 1e+10
        %v695 = vsel %vm692, %v601, 1e+10
        %v696 = vsel %vm692, %v603, 1e+10
        %v697 = vsel %vm692, %v605, 1e+10
        %v698 = vsel %vm692, %v607, 1e+10
        %v699 = vsel %vm692, %v609, 1e+10
        %v700 = vsel %vm692, %v611, 1e+10
        %v701 = vsel %vm692, %v613, 1e+10
        %v702 = vsel %vm692, %v615, 1e+10
        %v703 = vsel %vm692, %v617, 1e+10
        %v704 = vsel %vm692, %v619, 1e+10
        %v705 = vsel %vm692, %v621, 1e+10
        %v706 = vsel %vm692, %v623, 1e+10
        %v707 = vsel %vm692, %v625, 1e+10
        %v708 = vsel %vm692, %v627, 1e+10
        %v709 = vsel %vm692, %v629, 1e+10
        %v710 = vsel %vm692, %v631, 1e+10
        %v711 = vsel %vm692, %v633, 1e+10
        %v712 = vsel %vm692, %v635, 1e+10
        %v713 = vsel %vm692, %v637, 1e+10
        %v714 = vsel %vm692, %v639, 1e+10
        %v715 = vsel %vm692, %v641, 1e+10
        %v716 = vsel %vm692, %v643, 1e+10
        %v717 = vsel %vm692, %v645, 1e+10
        %v718 = vsel %vm692, %v647, 1e+10
        %v719 = vsel %vm692, %v649, 1e+10
        %v720 = vsel %vm692, %v651, 1e+10
        %v721 = vsel %vm692, %v653, 1e+10
        %v722 = vsel %vm692, %v655, 1e+10
        %v723 = vsel %vm692, %v657, 1e+10
        %v724 = vsel %vm692, %v659, 1e+10
        %v725 = vmul.f32 %v372, %v693
        %v726 = vmul.f32 %v373, %v694
        %v727 = vmul.f32 %v374, %v695
        %v728 = vmul.f32 %v375, %v696
        %v729 = vmul.f32 %v376, %v697
        %v730 = vmul.f32 %v377, %v698
        %v731 = vmul.f32 %v378, %v699
        %v732 = vmul.f32 %v379, %v700
        %v733 = vmul.f32 %v380, %v701
        %v734 = vmul.f32 %v381, %v702
        %v735 = vmul.f32 %v382, %v703
        %v736 = vmul.f32 %v383, %v704
        %v737 = vmul.f32 %v384, %v705
        %v738 = vmul.f32 %v385, %v706
        %v739 = vmul.f32 %v386, %v707
        %v740 = vmul.f32 %v387, %v708
        %v741 = vmul.f32 %v388, %v709
        %v742 = vmul.f32 %v389, %v710
        %v743 = vmul.f32 %v390, %v711
        %v744 = vmul.f32 %v391, %v712
        %v745 = vmul.f32 %v392, %v713
        %v746 = vmul.f32 %v393, %v714
        %v747 = vmul.f32 %v394, %v715
        %v748 = vmul.f32 %v395, %v716
        %v749 = vmul.f32 %v396, %v717
        %v750 = vmul.f32 %v397, %v718
        %v751 = vmul.f32 %v398, %v719
        %v752 = vmul.f32 %v399, %v720
        %v753 = vmul.f32 %v400, %v721
        %v754 = vmul.f32 %v401, %v722
        %v755 = vmul.f32 %v402, %v723
        %v756 = vmul.f32 %v403, %v724
        %v757 = vld [vmem:[#allocation2] sm:$0xf]
        %v758 = vld [vmem:[#allocation2 + $0x4] sm:$0xf]
        %v759 = vld [vmem:[#allocation2 + $0x8] sm:$0xf]
        %v760 = vld [vmem:[#allocation2 + $0xc] sm:$0xf]
        %v761 = vld [vmem:[#allocation2 + $0x10] sm:$0xf]
        %v762 = vld [vmem:[#allocation2 + $0x14] sm:$0xf]
        %v763 = vld [vmem:[#allocation2 + $0x18] sm:$0xf]
        %v764 = vld [vmem:[#allocation2 + $0x1c] sm:$0xf]
        %v765 = vld [vmem:[#allocation2 + $0x20] sm:$0xf]
        %v766 = vld [vmem:[#allocation2 + $0x24] sm:$0xf]
        %v767 = vld [vmem:[#allocation2 + $0x28] sm:$0xf]
        %v768 = vld [vmem:[#allocation2 + $0x2c] sm:$0xf]
        %v769 = vld [vmem:[#allocation2 + $0x30] sm:$0xf]
        %v770 = vld [vmem:[#allocation2 + $0x34] sm:$0xf]
        %v771 = vld [vmem:[#allocation2 + $0x38] sm:$0xf]
        %v772 = vld [vmem:[#allocation2 + $0x3c] sm:$0xf]
        %v773 = vpack.c.bf16 %v726, %v725
        %v774 = vpack.c.bf16 %v728, %v727
        %v775 = vpack.c.bf16 %v730, %v729
        %v776 = vpack.c.bf16 %v732, %v731
        %v777 = vpack.c.bf16 %v734, %v733
        %v778 = vpack.c.bf16 %v736, %v735
        %v779 = vpack.c.bf16 %v738, %v737
        %v780 = vpack.c.bf16 %v740, %v739
        %v781 = vpack.c.bf16 %v742, %v741
        %v782 = vpack.c.bf16 %v744, %v743
        %v783 = vpack.c.bf16 %v746, %v745
        %v784 = vpack.c.bf16 %v748, %v747
        %v785 = vpack.c.bf16 %v750, %v749
        %v786 = vpack.c.bf16 %v752, %v751
        %v787 = vpack.c.bf16 %v754, %v753
        %v788 = vpack.c.bf16 %v756, %v755
        %v789 = vunpack.c.l.bf16 %v773
        %v790 = vunpack.c.h.bf16 %v773
        %v791 = vunpack.c.l.bf16 %v774
        %v792 = vunpack.c.h.bf16 %v774
        %v793 = vunpack.c.l.bf16 %v775
        %v794 = vunpack.c.h.bf16 %v775
        %v795 = vunpack.c.l.bf16 %v776
        %v796 = vunpack.c.h.bf16 %v776
        %v797 = vunpack.c.l.bf16 %v777
        %v798 = vunpack.c.h.bf16 %v777
        %v799 = vunpack.c.l.bf16 %v778
        %v800 = vunpack.c.h.bf16 %v778
        %v801 = vunpack.c.l.bf16 %v779
        %v802 = vunpack.c.h.bf16 %v779
        %v803 = vunpack.c.l.bf16 %v780
        %v804 = vunpack.c.h.bf16 %v780
        %v805 = vunpack.c.l.bf16 %v781
        %v806 = vunpack.c.h.bf16 %v781
        %v807 = vunpack.c.l.bf16 %v782
        %v808 = vunpack.c.h.bf16 %v782
        %v809 = vunpack.c.l.bf16 %v783
        %v810 = vunpack.c.h.bf16 %v783
        %v811 = vunpack.c.l.bf16 %v784
        %v812 = vunpack.c.h.bf16 %v784
        %v813 = vunpack.c.l.bf16 %v785
        %v814 = vunpack.c.h.bf16 %v785
        %v815 = vunpack.c.l.bf16 %v786
        %v816 = vunpack.c.h.bf16 %v786
        %v817 = vunpack.c.l.bf16 %v787
        %v818 = vunpack.c.h.bf16 %v787
        %v819 = vunpack.c.l.bf16 %v788
        %v820 = vunpack.c.h.bf16 %v788
        %v821 = vsub.f32 %v725, %v789
        %v822 = vsub.f32 %v726, %v790
        %v823 = vsub.f32 %v727, %v791
        %v824 = vsub.f32 %v728, %v792
        %v825 = vsub.f32 %v729, %v793
        %v826 = vsub.f32 %v730, %v794
        %v827 = vsub.f32 %v731, %v795
        %v828 = vsub.f32 %v732, %v796
        %v829 = vsub.f32 %v733, %v797
        %v830 = vsub.f32 %v734, %v798
        %v831 = vsub.f32 %v735, %v799
        %v832 = vsub.f32 %v736, %v800
        %v833 = vsub.f32 %v737, %v801
        %v834 = vsub.f32 %v738, %v802
        %v835 = vsub.f32 %v739, %v803
        %v836 = vsub.f32 %v740, %v804
        %v837 = vsub.f32 %v741, %v805
        %v838 = vsub.f32 %v742, %v806
        %v839 = vsub.f32 %v743, %v807
        %v840 = vsub.f32 %v744, %v808
        %v841 = vsub.f32 %v745, %v809
        %v842 = vsub.f32 %v746, %v810
        %v843 = vsub.f32 %v747, %v811
        %v844 = vsub.f32 %v748, %v812
        %v845 = vsub.f32 %v749, %v813
        %v846 = vsub.f32 %v750, %v814
        %v847 = vsub.f32 %v751, %v815
        %v848 = vsub.f32 %v752, %v816
        %v849 = vsub.f32 %v753, %v817
        %v850 = vsub.f32 %v754, %v818
        %v851 = vsub.f32 %v755, %v819
        %v852 = vsub.f32 %v756, %v820
        %v853 = vpack.c.bf16 %v822, %v821
        %v854 = vpack.c.bf16 %v824, %v823
        %v855 = vpack.c.bf16 %v826, %v825
        %v856 = vpack.c.bf16 %v828, %v827
        %v857 = vpack.c.bf16 %v830, %v829
        %v858 = vpack.c.bf16 %v832, %v831
        %v859 = vpack.c.bf16 %v834, %v833
        %v860 = vpack.c.bf16 %v836, %v835
        %v861 = vpack.c.bf16 %v838, %v837
        %v862 = vpack.c.bf16 %v840, %v839
        %v863 = vpack.c.bf16 %v842, %v841
        %v864 = vpack.c.bf16 %v844, %v843
        %v865 = vpack.c.bf16 %v846, %v845
        %v866 = vpack.c.bf16 %v848, %v847
        %v867 = vpack.c.bf16 %v850, %v849
        %v868 = vpack.c.bf16 %v852, %v851
        %v885 = vunpack.c.l.b16 %v757
        %v886 = vunpack.c.l.b16 %v758
        %v887 = vunpack.c.l.b16 %v759
        %v888 = vunpack.c.l.b16 %v760
        %v889 = vunpack.c.l.b16 %v761
        %v890 = vunpack.c.l.b16 %v762
        %v891 = vunpack.c.l.b16 %v763
        %v892 = vunpack.c.l.b16 %v764
        %v893 = vunpack.c.l.b16 %v765
        %v894 = vunpack.c.l.b16 %v766
        %v895 = vunpack.c.l.b16 %v767
        %v896 = vunpack.c.l.b16 %v768
        %v897 = vunpack.c.l.b16 %v769
        %v898 = vunpack.c.l.b16 %v770
        %v899 = vunpack.c.l.b16 %v771
        %v900 = vunpack.c.l.b16 %v772
        %v901 = vpack.c.b16 %v886, %v885
        %v902 = vpack.c.b16 %v888, %v887
        %v903 = vpack.c.b16 %v890, %v889
        %v904 = vpack.c.b16 %v892, %v891
        %v905 = vpack.c.b16 %v894, %v893
        %v906 = vpack.c.b16 %v896, %v895
        %v907 = vpack.c.b16 %v898, %v897
        %v908 = vpack.c.b16 %v900, %v899
        %917 = vmatprep.subr.bf16.mxu0 0
        %918 = vmatpush1.bf16.msra.mxu0 %v901
        %919 = vmatprep.subr.bf16.mxu0 0
        %920 = vmatpush1.bf16.msra.mxu0 %v902
        %921 = vmatprep.subr.bf16.mxu0 0
        %922 = vmatpush1.bf16.msra.mxu0 %v903
        %923 = vmatprep.subr.bf16.mxu0 0
        %924 = vmatpush1.bf16.msra.mxu0 %v904
        %925 = vmatprep.subr.bf16.mxu0 0
        %926 = vmatpush1.bf16.msra.mxu0 %v905
        %927 = vmatprep.subr.bf16.mxu0 0
        %928 = vmatpush1.bf16.msra.mxu0 %v906
        %929 = vmatprep.subr.bf16.mxu0 0
        %930 = vmatpush1.bf16.msra.mxu0 %v907
        %931 = vmatprep.subr.bf16.mxu0 0
        %932 = vmatpush1.bf16.msra.mxu0 %v908
        %933 = vmatprep.subr.bf16.mxu0 0
        %934 = vmatpush1.bf16.msra.mxu0 0
        %935 = vmatprep.subr.bf16.mxu0 0
        %936 = vmatpush1.bf16.msra.mxu0 0
        %937 = vmatprep.subr.bf16.mxu0 0
        %938 = vmatpush1.bf16.msra.mxu0 0
        %939 = vmatprep.subr.bf16.mxu0 0
        %940 = vmatpush1.bf16.msra.mxu0 0
        %941 = vmatprep.subr.bf16.mxu0 0
        %942 = vmatpush1.bf16.msra.mxu0 0
        %943 = vmatprep.subr.bf16.mxu0 0
        %944 = vmatpush1.bf16.msra.mxu0 0
        %945 = vmatprep.subr.bf16.mxu0 0
        %946 = vmatpush1.bf16.msra.mxu0 0
        %947 = vmatprep.subr.bf16.mxu0 0
        %948 = vmatpush1.bf16.msra.mxu0 0
        %949 = vmatprep.mubr.bf16.mxu0 0
        %950 = vmatmul.mubr.bf16.gmra.mrb[0].mxu0 %v853
        %v951 = vpop.f32.mrb[0].mxu0
        %v952 = vadd.f32 0.0, %v951
        %v953 = vpop.f32.mrb[0].mxu0
        %v954 = vpop.f32.mrb[0].mxu0
        %v955 = vadd.f32 0.0, %v954
        %v956 = vpop.f32.mrb[0].mxu0
        %957 = vmatprep.mubr.bf16.mxu0 0
        %958 = vmatmul.mubr.bf16.gmra.mrb[0].mxu0 %v854
        %v959 = vpop.f32.mrb[0].mxu0
        %v960 = vadd.f32 0.0, %v959
        %v961 = vpop.f32.mrb[0].mxu0
        %v962 = vpop.f32.mrb[0].mxu0
        %v963 = vadd.f32 0.0, %v962
        %v964 = vpop.f32.mrb[0].mxu0
        %965 = vmatprep.mubr.bf16.mxu0 0
        %966 = vmatmul.mubr.bf16.gmra.mrb[0].mxu0 %v855
        %v967 = vpop.f32.mrb[0].mxu0
        %v968 = vadd.f32 0.0, %v967
        %v969 = vpop.f32.mrb[0].mxu0
        %v970 = vpop.f32.mrb[0].mxu0
        %v971 = vadd.f32 0.0, %v970
        %v972 = vpop.f32.mrb[0].mxu0
        %973 = vmatprep.mubr.bf16.mxu0 0
        %974 = vmatmul.mubr.bf16.gmra.mrb[0].mxu0 %v856
        %v975 = vpop.f32.mrb[0].mxu0
        %v976 = vadd.f32 0.0, %v975
        %v977 = vpop.f32.mrb[0].mxu0
        %v978 = vpop.f32.mrb[0].mxu0
        %v979 = vadd.f32 0.0, %v978
        %v980 = vpop.f32.mrb[0].mxu0
        %981 = vmatprep.mubr.bf16.mxu0 0
        %982 = vmatmul.mubr.bf16.gmra.mrb[0].mxu0 %v857
        %v983 = vpop.f32.mrb[0].mxu0
        %v984 = vadd.f32 0.0, %v983
        %v985 = vpop.f32.mrb[0].mxu0
        %v986 = vpop.f32.mrb[0].mxu0
        %v987 = vadd.f32 0.0, %v986
        %v988 = vpop.f32.mrb[0].mxu0
        %989 = vmatprep.mubr.bf16.mxu0 0
        %990 = vmatmul.mubr.bf16.gmra.mrb[0].mxu0 %v858
        %v991 = vpop.f32.mrb[0].mxu0
        %v992 = vadd.f32 0.0, %v991
        %v993 = vpop.f32.mrb[0].mxu0
        %v994 = vpop.f32.mrb[0].mxu0
        %v995 = vadd.f32 0.0, %v994
        %v996 = vpop.f32.mrb[0].mxu0
        %997 = vmatprep.mubr.bf16.mxu0 0
        %998 = vmatmul.mubr.bf16.gmra.mrb[0].mxu0 %v859
        %v999 = vpop.f32.mrb[0].mxu0
        %v1000 = vadd.f32 0.0, %v999
        %v1001 = vpop.f32.mrb[0].mxu0
        %v1002 = vpop.f32.mrb[0].mxu0
        %v1003 = vadd.f32 0.0, %v1002
        %v1004 = vpop.f32.mrb[0].mxu0
        %1005 = vmatprep.mubr.bf16.mxu0 0
        %1006 = vmatmul.mubr.bf16.gmra.mrb[0].mxu0 %v860
        %v1007 = vpop.f32.mrb[0].mxu0
        %v1008 = vadd.f32 0.0, %v1007
        %v1009 = vpop.f32.mrb[0].mxu0
        %v1010 = vpop.f32.mrb[0].mxu0
        %v1011 = vadd.f32 0.0, %v1010
        %v1012 = vpop.f32.mrb[0].mxu0
        %1013 = vmatprep.mubr.bf16.mxu0 0
        %1014 = vmatmul.mubr.bf16.gmra.mrb[0].mxu0 %v861
        %v1015 = vpop.f32.mrb[0].mxu0
        %v1016 = vadd.f32 0.0, %v1015
        %v1017 = vpop.f32.mrb[0].mxu0
        %v1018 = vpop.f32.mrb[0].mxu0
        %v1019 = vadd.f32 0.0, %v1018
        %v1020 = vpop.f32.mrb[0].mxu0
        %1021 = vmatprep.mubr.bf16.mxu0 0
        %1022 = vmatmul.mubr.bf16.gmra.mrb[0].mxu0 %v862
        %v1023 = vpop.f32.mrb[0].mxu0
        %v1024 = vadd.f32 0.0, %v1023
        %v1025 = vpop.f32.mrb[0].mxu0
        %v1026 = vpop.f32.mrb[0].mxu0
        %v1027 = vadd.f32 0.0, %v1026
        %v1028 = vpop.f32.mrb[0].mxu0
        %1029 = vmatprep.mubr.bf16.mxu0 0
        %1030 = vmatmul.mubr.bf16.gmra.mrb[0].mxu0 %v863
        %v1031 = vpop.f32.mrb[0].mxu0
        %v1032 = vadd.f32 0.0, %v1031
        %v1033 = vpop.f32.mrb[0].mxu0
        %v1034 = vpop.f32.mrb[0].mxu0
        %v1035 = vadd.f32 0.0, %v1034
        %v1036 = vpop.f32.mrb[0].mxu0
        %1037 = vmatprep.mubr.bf16.mxu0 0
        %1038 = vmatmul.mubr.bf16.gmra.mrb[0].mxu0 %v864
        %v1039 = vpop.f32.mrb[0].mxu0
        %v1040 = vadd.f32 0.0, %v1039
        %v1041 = vpop.f32.mrb[0].mxu0
        %v1042 = vpop.f32.mrb[0].mxu0
        %v1043 = vadd.f32 0.0, %v1042
        %v1044 = vpop.f32.mrb[0].mxu0
        %1045 = vmatprep.mubr.bf16.mxu0 0
        %1046 = vmatmul.mubr.bf16.gmra.mrb[0].mxu0 %v865
        %v1047 = vpop.f32.mrb[0].mxu0
        %v1048 = vadd.f32 0.0, %v1047
        %v1049 = vpop.f32.mrb[0].mxu0
        %v1050 = vpop.f32.mrb[0].mxu0
        %v1051 = vadd.f32 0.0, %v1050
        %v1052 = vpop.f32.mrb[0].mxu0
        %1053 = vmatprep.mubr.bf16.mxu0 0
        %1054 = vmatmul.mubr.bf16.gmra.mrb[0].mxu0 %v866
        %v1055 = vpop.f32.mrb[0].mxu0
        %v1056 = vadd.f32 0.0, %v1055
        %v1057 = vpop.f32.mrb[0].mxu0
        %v1058 = vpop.f32.mrb[0].mxu0
        %v1059 = vadd.f32 0.0, %v1058
        %v1060 = vpop.f32.mrb[0].mxu0
        %1061 = vmatprep.mubr.bf16.mxu0 0
        %1062 = vmatmul.mubr.bf16.gmra.mrb[0].mxu0 %v867
        %v1063 = vpop.f32.mrb[0].mxu0
        %v1064 = vadd.f32 0.0, %v1063
        %v1065 = vpop.f32.mrb[0].mxu0
        %v1066 = vpop.f32.mrb[0].mxu0
        %v1067 = vadd.f32 0.0, %v1066
        %v1068 = vpop.f32.mrb[0].mxu0
        %1069 = vmatprep.mubr.bf16.mxu0 0
        %1070 = vmatmul.mubr.bf16.gmra.mrb[0].mxu0 %v868
        %v1071 = vpop.f32.mrb[0].mxu0
        %v1072 = vadd.f32 0.0, %v1071
        %v1073 = vpop.f32.mrb[0].mxu0
        %v1074 = vpop.f32.mrb[0].mxu0
        %v1075 = vadd.f32 0.0, %v1074
        %v1076 = vpop.f32.mrb[0].mxu0
        %1077 = vdwg.mxu0
        %1078 = vmatprep.subr.bf16.mxu0 0
        %1079 = vmatpush1.bf16.msra.mxu0 %v901
        %1080 = vmatprep.subr.bf16.mxu0 0
        %1081 = vmatpush1.bf16.msra.mxu0 %v902
        %1082 = vmatprep.subr.bf16.mxu0 0
        %1083 = vmatpush1.bf16.msra.mxu0 %v903
        %1084 = vmatprep.subr.bf16.mxu0 0
        %1085 = vmatpush1.bf16.msra.mxu0 %v904
        %1086 = vmatprep.subr.bf16.mxu0 0
        %1087 = vmatpush1.bf16.msra.mxu0 %v905
        %1088 = vmatprep.subr.bf16.mxu0 0
        %1089 = vmatpush1.bf16.msra.mxu0 %v906
        %1090 = vmatprep.subr.bf16.mxu0 0
        %1091 = vmatpush1.bf16.msra.mxu0 %v907
        %1092 = vmatprep.subr.bf16.mxu0 0
        %1093 = vmatpush1.bf16.msra.mxu0 %v908
        %1094 = vmatprep.subr.bf16.mxu0 0
        %1095 = vmatpush1.bf16.msra.mxu0 0
        %1096 = vmatprep.subr.bf16.mxu0 0
        %1097 = vmatpush1.bf16.msra.mxu0 0
        %1098 = vmatprep.subr.bf16.mxu0 0
        %1099 = vmatpush1.bf16.msra.mxu0 0
        %1100 = vmatprep.subr.bf16.mxu0 0
        %1101 = vmatpush1.bf16.msra.mxu0 0
        %1102 = vmatprep.subr.bf16.mxu0 0
        %1103 = vmatpush1.bf16.msra.mxu0 0
        %1104 = vmatprep.subr.bf16.mxu0 0
        %1105 = vmatpush1.bf16.msra.mxu0 0
        %1106 = vmatprep.subr.bf16.mxu0 0
        %1107 = vmatpush1.bf16.msra.mxu0 0
        %1108 = vmatprep.subr.bf16.mxu0 0
        %1109 = vmatpush1.bf16.msra.mxu0 0
        %1110 = vmatprep.mubr.bf16.mxu0 0
        %1111 = vmatmul.mubr.bf16.gmra.mrb[0].mxu0 %v773
        %v1112 = vpop.f32.mrb[0].mxu0
        %v1113 = vadd.f32 %v952, %v1112
        %v1114 = vpop.f32.mrb[0].mxu0
        %v1115 = vpop.f32.mrb[0].mxu0
        %v1116 = vadd.f32 %v955, %v1115
        %v1117 = vpop.f32.mrb[0].mxu0
        %1118 = vmatprep.mubr.bf16.mxu0 0
        %1119 = vmatmul.mubr.bf16.gmra.mrb[0].mxu0 %v774
        %v1120 = vpop.f32.mrb[0].mxu0
        %v1121 = vadd.f32 %v960, %v1120
        %v1122 = vpop.f32.mrb[0].mxu0
        %v1123 = vpop.f32.mrb[0].mxu0
        %v1124 = vadd.f32 %v963, %v1123
        %v1125 = vpop.f32.mrb[0].mxu0
        %1126 = vmatprep.mubr.bf16.mxu0 0
        %1127 = vmatmul.mubr.bf16.gmra.mrb[0].mxu0 %v775
        %v1128 = vpop.f32.mrb[0].mxu0
        %v1129 = vadd.f32 %v968, %v1128
        %v1130 = vpop.f32.mrb[0].mxu0
        %v1131 = vpop.f32.mrb[0].mxu0
        %v1132 = vadd.f32 %v971, %v1131
        %v1133 = vpop.f32.mrb[0].mxu0
        %1134 = vmatprep.mubr.bf16.mxu0 0
        %1135 = vmatmul.mubr.bf16.gmra.mrb[0].mxu0 %v776
        %v1136 = vpop.f32.mrb[0].mxu0
        %v1137 = vadd.f32 %v976, %v1136
        %v1138 = vpop.f32.mrb[0].mxu0
        %v1139 = vpop.f32.mrb[0].mxu0
        %v1140 = vadd.f32 %v979, %v1139
        %v1141 = vpop.f32.mrb[0].mxu0
        %1142 = vmatprep.mubr.bf16.mxu0 0
        %1143 = vmatmul.mubr.bf16.gmra.mrb[0].mxu0 %v777
        %v1144 = vpop.f32.mrb[0].mxu0
        %v1145 = vadd.f32 %v984, %v1144
        %v1146 = vpop.f32.mrb[0].mxu0
        %v1147 = vpop.f32.mrb[0].mxu0
        %v1148 = vadd.f32 %v987, %v1147
        %v1149 = vpop.f32.mrb[0].mxu0
        %1150 = vmatprep.mubr.bf16.mxu0 0
        %1151 = vmatmul.mubr.bf16.gmra.mrb[0].mxu0 %v778
        %v1152 = vpop.f32.mrb[0].mxu0
        %v1153 = vadd.f32 %v992, %v1152
        %v1154 = vpop.f32.mrb[0].mxu0
        %v1155 = vpop.f32.mrb[0].mxu0
        %v1156 = vadd.f32 %v995, %v1155
        %v1157 = vpop.f32.mrb[0].mxu0
        %1158 = vmatprep.mubr.bf16.mxu0 0
        %1159 = vmatmul.mubr.bf16.gmra.mrb[0].mxu0 %v779
        %v1160 = vpop.f32.mrb[0].mxu0
        %v1161 = vadd.f32 %v1000, %v1160
        %v1162 = vpop.f32.mrb[0].mxu0
        %v1163 = vpop.f32.mrb[0].mxu0
        %v1164 = vadd.f32 %v1003, %v1163
        %v1165 = vpop.f32.mrb[0].mxu0
        %1166 = vmatprep.mubr.bf16.mxu0 0
        %1167 = vmatmul.mubr.bf16.gmra.mrb[0].mxu0 %v780
        %v1168 = vpop.f32.mrb[0].mxu0
        %v1169 = vadd.f32 %v1008, %v1168
        %v1170 = vpop.f32.mrb[0].mxu0
        %v1171 = vpop.f32.mrb[0].mxu0
        %v1172 = vadd.f32 %v1011, %v1171
        %v1173 = vpop.f32.mrb[0].mxu0
        %1174 = vmatprep.mubr.bf16.mxu0 0
        %1175 = vmatmul.mubr.bf16.gmra.mrb[0].mxu0 %v781
        %v1176 = vpop.f32.mrb[0].mxu0
        %v1177 = vadd.f32 %v1016, %v1176
        %v1178 = vpop.f32.mrb[0].mxu0
        %v1179 = vpop.f32.mrb[0].mxu0
        %v1180 = vadd.f32 %v1019, %v1179
        %v1181 = vpop.f32.mrb[0].mxu0
        %1182 = vmatprep.mubr.bf16.mxu0 0
        %1183 = vmatmul.mubr.bf16.gmra.mrb[0].mxu0 %v782
        %v1184 = vpop.f32.mrb[0].mxu0
        %v1185 = vadd.f32 %v1024, %v1184
        %v1186 = vpop.f32.mrb[0].mxu0
        %v1187 = vpop.f32.mrb[0].mxu0
        %v1188 = vadd.f32 %v1027, %v1187
        %v1189 = vpop.f32.mrb[0].mxu0
        %1190 = vmatprep.mubr.bf16.mxu0 0
        %1191 = vmatmul.mubr.bf16.gmra.mrb[0].mxu0 %v783
        %v1192 = vpop.f32.mrb[0].mxu0
        %v1193 = vadd.f32 %v1032, %v1192
        %v1194 = vpop.f32.mrb[0].mxu0
        %v1195 = vpop.f32.mrb[0].mxu0
        %v1196 = vadd.f32 %v1035, %v1195
        %v1197 = vpop.f32.mrb[0].mxu0
        %1198 = vmatprep.mubr.bf16.mxu0 0
        %1199 = vmatmul.mubr.bf16.gmra.mrb[0].mxu0 %v784
        %v1200 = vpop.f32.mrb[0].mxu0
        %v1201 = vadd.f32 %v1040, %v1200
        %v1202 = vpop.f32.mrb[0].mxu0
        %v1203 = vpop.f32.mrb[0].mxu0
        %v1204 = vadd.f32 %v1043, %v1203
        %v1205 = vpop.f32.mrb[0].mxu0
        %1206 = vmatprep.mubr.bf16.mxu0 0
        %1207 = vmatmul.mubr.bf16.gmra.mrb[0].mxu0 %v785
        %v1208 = vpop.f32.mrb[0].mxu0
        %v1209 = vadd.f32 %v1048, %v1208
        %v1210 = vpop.f32.mrb[0].mxu0
        %v1211 = vpop.f32.mrb[0].mxu0
        %v1212 = vadd.f32 %v1051, %v1211
        %v1213 = vpop.f32.mrb[0].mxu0
        %1214 = vmatprep.mubr.bf16.mxu0 0
        %1215 = vmatmul.mubr.bf16.gmra.mrb[0].mxu0 %v786
        %v1216 = vpop.f32.mrb[0].mxu0
        %v1217 = vadd.f32 %v1056, %v1216
        %v1218 = vpop.f32.mrb[0].mxu0
        %v1219 = vpop.f32.mrb[0].mxu0
        %v1220 = vadd.f32 %v1059, %v1219
        %v1221 = vpop.f32.mrb[0].mxu0
        %1222 = vmatprep.mubr.bf16.mxu0 0
        %1223 = vmatmul.mubr.bf16.gmra.mrb[0].mxu0 %v787
        %v1224 = vpop.f32.mrb[0].mxu0
        %v1225 = vadd.f32 %v1064, %v1224
        %v1226 = vpop.f32.mrb[0].mxu0
        %v1227 = vpop.f32.mrb[0].mxu0
        %v1228 = vadd.f32 %v1067, %v1227
        %v1229 = vpop.f32.mrb[0].mxu0
        %1230 = vmatprep.mubr.bf16.mxu0 0
        %1231 = vmatmul.mubr.bf16.gmra.mrb[0].mxu0 %v788
        %v1232 = vpop.f32.mrb[0].mxu0
        %v1233 = vadd.f32 %v1072, %v1232
        %v1234 = vpop.f32.mrb[0].mxu0
        %v1235 = vpop.f32.mrb[0].mxu0
        %v1236 = vadd.f32 %v1075, %v1235
        %v1237 = vpop.f32.mrb[0].mxu0
        %1238 = vdwg.mxu0
        %v1239 = vsub.f32 0.0, %v1113
        %v1240 = vsub.f32 0.0, %v1116
        %v1241 = vsub.f32 0.0, %v1121
        %v1242 = vsub.f32 0.0, %v1124
        %v1243 = vsub.f32 0.0, %v1129
        %v1244 = vsub.f32 0.0, %v1132
        %v1245 = vsub.f32 0.0, %v1137
        %v1246 = vsub.f32 0.0, %v1140
        %v1247 = vsub.f32 0.0, %v1145
        %v1248 = vsub.f32 0.0, %v1148
        %v1249 = vsub.f32 0.0, %v1153
        %v1250 = vsub.f32 0.0, %v1156
        %v1251 = vsub.f32 0.0, %v1161
        %v1252 = vsub.f32 0.0, %v1164
        %v1253 = vsub.f32 0.0, %v1169
        %v1254 = vsub.f32 0.0, %v1172
        %v1255 = vsub.f32 0.0, %v1177
        %v1256 = vsub.f32 0.0, %v1180
        %v1257 = vsub.f32 0.0, %v1185
        %v1258 = vsub.f32 0.0, %v1188
        %v1259 = vsub.f32 0.0, %v1193
        %v1260 = vsub.f32 0.0, %v1196
        %v1261 = vsub.f32 0.0, %v1201
        %v1262 = vsub.f32 0.0, %v1204
        %v1263 = vsub.f32 0.0, %v1209
        %v1264 = vsub.f32 0.0, %v1212
        %v1265 = vsub.f32 0.0, %v1217
        %v1266 = vsub.f32 0.0, %v1220
        %v1267 = vsub.f32 0.0, %v1225
        %v1268 = vsub.f32 0.0, %v1228
        %v1269 = vsub.f32 0.0, %v1233
        %v1270 = vsub.f32 0.0, %v1236
        %v1271 = vmul.f32 %v1239, 1.442695
        %v1272 = vpow.pop %v1271
        %v1273 = vmul.f32 %v1240, 1.442695
        %v1274 = vpow.pop %v1273
        %v1275 = vmul.f32 %v1241, 1.442695
        %v1276 = vpow.pop %v1275
        %v1277 = vmul.f32 %v1242, 1.442695
        %v1278 = vpow.pop %v1277
        %v1279 = vmul.f32 %v1243, 1.442695
        %v1280 = vpow.pop %v1279
        %v1281 = vmul.f32 %v1244, 1.442695
        %v1282 = vpow.pop %v1281
        %v1283 = vmul.f32 %v1245, 1.442695
        %v1284 = vpow.pop %v1283
        %v1285 = vmul.f32 %v1246, 1.442695
        %v1286 = vpow.pop %v1285
        %v1287 = vmul.f32 %v1247, 1.442695
        %v1288 = vpow.pop %v1287
        %v1289 = vmul.f32 %v1248, 1.442695
        %v1290 = vpow.pop %v1289
        %v1291 = vmul.f32 %v1249, 1.442695
        %v1292 = vpow.pop %v1291
        %v1293 = vmul.f32 %v1250, 1.442695
        %v1294 = vpow.pop %v1293
        %v1295 = vmul.f32 %v1251, 1.442695
        %v1296 = vpow.pop %v1295
        %v1297 = vmul.f32 %v1252, 1.442695
        %v1298 = vpow.pop %v1297
        %v1299 = vmul.f32 %v1253, 1.442695
        %v1300 = vpow.pop %v1299
        %v1301 = vmul.f32 %v1254, 1.442695
        %v1302 = vpow.pop %v1301
        %v1303 = vmul.f32 %v1255, 1.442695
        %v1304 = vpow.pop %v1303
        %v1305 = vmul.f32 %v1256, 1.442695
        %v1306 = vpow.pop %v1305
        %v1307 = vmul.f32 %v1257, 1.442695
        %v1308 = vpow.pop %v1307
        %v1309 = vmul.f32 %v1258, 1.442695
        %v1310 = vpow.pop %v1309
        %v1311 = vmul.f32 %v1259, 1.442695
        %v1312 = vpow.pop %v1311
        %v1313 = vmul.f32 %v1260, 1.442695
        %v1314 = vpow.pop %v1313
        %v1315 = vmul.f32 %v1261, 1.442695
        %v1316 = vpow.pop %v1315
        %v1317 = vmul.f32 %v1262, 1.442695
        %v1318 = vpow.pop %v1317
        %v1319 = vmul.f32 %v1263, 1.442695
        %v1320 = vpow.pop %v1319
        %v1321 = vmul.f32 %v1264, 1.442695
        %v1322 = vpow.pop %v1321
        %v1323 = vmul.f32 %v1265, 1.442695
        %v1324 = vpow.pop %v1323
        %v1325 = vmul.f32 %v1266, 1.442695
        %v1326 = vpow.pop %v1325
        %v1327 = vmul.f32 %v1267, 1.442695
        %v1328 = vpow.pop %v1327
        %v1329 = vmul.f32 %v1268, 1.442695
        %v1330 = vpow.pop %v1329
        %v1331 = vmul.f32 %v1269, 1.442695
        %v1332 = vpow.pop %v1331
        %v1333 = vmul.f32 %v1270, 1.442695
        %v1334 = vpow.pop %v1333
        %v1335 = vsub.f32 0.0, %v725
        %v1336 = vsub.f32 0.0, %v726
        %v1337 = vsub.f32 0.0, %v727
        %v1338 = vsub.f32 0.0, %v728
        %v1339 = vsub.f32 0.0, %v729
        %v1340 = vsub.f32 0.0, %v730
        %v1341 = vsub.f32 0.0, %v731
        %v1342 = vsub.f32 0.0, %v732
        %v1343 = vsub.f32 0.0, %v733
        %v1344 = vsub.f32 0.0, %v734
        %v1345 = vsub.f32 0.0, %v735
        %v1346 = vsub.f32 0.0, %v736
        %v1347 = vsub.f32 0.0, %v737
        %v1348 = vsub.f32 0.0, %v738
        %v1349 = vsub.f32 0.0, %v739
        %v1350 = vsub.f32 0.0, %v740
        %v1351 = vsub.f32 0.0, %v741
        %v1352 = vsub.f32 0.0, %v742
        %v1353 = vsub.f32 0.0, %v743
        %v1354 = vsub.f32 0.0, %v744
        %v1355 = vsub.f32 0.0, %v745
        %v1356 = vsub.f32 0.0, %v746
        %v1357 = vsub.f32 0.0, %v747
        %v1358 = vsub.f32 0.0, %v748
        %v1359 = vsub.f32 0.0, %v749
        %v1360 = vsub.f32 0.0, %v750
        %v1361 = vsub.f32 0.0, %v751
        %v1362 = vsub.f32 0.0, %v752
        %v1363 = vsub.f32 0.0, %v753
        %v1364 = vsub.f32 0.0, %v754
        %v1365 = vsub.f32 0.0, %v755
        %v1366 = vsub.f32 0.0, %v756
        %v1367 = vmul.f32 %v1335, 1.442695
        %v1368 = vpow.pop %v1367
        %v1369 = vmul.f32 %v1336, 1.442695
        %v1370 = vpow.pop %v1369
        %v1371 = vmul.f32 %v1337, 1.442695
        %v1372 = vpow.pop %v1371
        %v1373 = vmul.f32 %v1338, 1.442695
        %v1374 = vpow.pop %v1373
        %v1375 = vmul.f32 %v1339, 1.442695
        %v1376 = vpow.pop %v1375
        %v1377 = vmul.f32 %v1340, 1.442695
        %v1378 = vpow.pop %v1377
        %v1379 = vmul.f32 %v1341, 1.442695
        %v1380 = vpow.pop %v1379
        %v1381 = vmul.f32 %v1342, 1.442695
        %v1382 = vpow.pop %v1381
        %v1383 = vmul.f32 %v1343, 1.442695
        %v1384 = vpow.pop %v1383
        %v1385 = vmul.f32 %v1344, 1.442695
        %v1386 = vpow.pop %v1385
        %v1387 = vmul.f32 %v1345, 1.442695
        %v1388 = vpow.pop %v1387
        %v1389 = vmul.f32 %v1346, 1.442695
        %v1390 = vpow.pop %v1389
        %v1391 = vmul.f32 %v1347, 1.442695
        %v1392 = vpow.pop %v1391
        %v1393 = vmul.f32 %v1348, 1.442695
        %v1394 = vpow.pop %v1393
        %v1395 = vmul.f32 %v1349, 1.442695
        %v1396 = vpow.pop %v1395
        %v1397 = vmul.f32 %v1350, 1.442695
        %v1398 = vpow.pop %v1397
        %v1399 = vmul.f32 %v1351, 1.442695
        %v1400 = vpow.pop %v1399
        %v1401 = vmul.f32 %v1352, 1.442695
        %v1402 = vpow.pop %v1401
        %v1403 = vmul.f32 %v1353, 1.442695
        %v1404 = vpow.pop %v1403
        %v1405 = vmul.f32 %v1354, 1.442695
        %v1406 = vpow.pop %v1405
        %v1407 = vmul.f32 %v1355, 1.442695
        %v1408 = vpow.pop %v1407
        %v1409 = vmul.f32 %v1356, 1.442695
        %v1410 = vpow.pop %v1409
        %v1411 = vmul.f32 %v1357, 1.442695
        %v1412 = vpow.pop %v1411
        %v1413 = vmul.f32 %v1358, 1.442695
        %v1414 = vpow.pop %v1413
        %v1415 = vmul.f32 %v1359, 1.442695
        %v1416 = vpow.pop %v1415
        %v1417 = vmul.f32 %v1360, 1.442695
        %v1418 = vpow.pop %v1417
        %v1419 = vmul.f32 %v1361, 1.442695
        %v1420 = vpow.pop %v1419
        %v1421 = vmul.f32 %v1362, 1.442695
        %v1422 = vpow.pop %v1421
        %v1423 = vmul.f32 %v1363, 1.442695
        %v1424 = vpow.pop %v1423
        %v1425 = vmul.f32 %v1364, 1.442695
        %v1426 = vpow.pop %v1425
        %v1427 = vmul.f32 %v1365, 1.442695
        %v1428 = vpow.pop %v1427
        %v1429 = vmul.f32 %v1366, 1.442695
        %v1430 = vpow.pop %v1429
        %v1431 = vsub.f32 1.0, %v1368
        %v1432 = vsub.f32 1.0, %v1370
        %v1433 = vsub.f32 1.0, %v1372
        %v1434 = vsub.f32 1.0, %v1374
        %v1435 = vsub.f32 1.0, %v1376
        %v1436 = vsub.f32 1.0, %v1378
        %v1437 = vsub.f32 1.0, %v1380
        %v1438 = vsub.f32 1.0, %v1382
        %v1439 = vsub.f32 1.0, %v1384
        %v1440 = vsub.f32 1.0, %v1386
        %v1441 = vsub.f32 1.0, %v1388
        %v1442 = vsub.f32 1.0, %v1390
        %v1443 = vsub.f32 1.0, %v1392
        %v1444 = vsub.f32 1.0, %v1394
        %v1445 = vsub.f32 1.0, %v1396
        %v1446 = vsub.f32 1.0, %v1398
        %v1447 = vsub.f32 1.0, %v1400
        %v1448 = vsub.f32 1.0, %v1402
        %v1449 = vsub.f32 1.0, %v1404
        %v1450 = vsub.f32 1.0, %v1406
        %v1451 = vsub.f32 1.0, %v1408
        %v1452 = vsub.f32 1.0, %v1410
        %v1453 = vsub.f32 1.0, %v1412
        %v1454 = vsub.f32 1.0, %v1414
        %v1455 = vsub.f32 1.0, %v1416
        %v1456 = vsub.f32 1.0, %v1418
        %v1457 = vsub.f32 1.0, %v1420
        %v1458 = vsub.f32 1.0, %v1422
        %v1459 = vsub.f32 1.0, %v1424
        %v1460 = vsub.f32 1.0, %v1426
        %v1461 = vsub.f32 1.0, %v1428
        %v1462 = vsub.f32 1.0, %v1430
        %v1463 = vmul.f32 %v1272, %v1431
        %v1464 = vmul.f32 %v1274, %v1432
        %v1465 = vmul.f32 %v1276, %v1433
        %v1466 = vmul.f32 %v1278, %v1434
        %v1467 = vmul.f32 %v1280, %v1435
        %v1468 = vmul.f32 %v1282, %v1436
        %v1469 = vmul.f32 %v1284, %v1437
        %v1470 = vmul.f32 %v1286, %v1438
        %v1471 = vmul.f32 %v1288, %v1439
        %v1472 = vmul.f32 %v1290, %v1440
        %v1473 = vmul.f32 %v1292, %v1441
        %v1474 = vmul.f32 %v1294, %v1442
        %v1475 = vmul.f32 %v1296, %v1443
        %v1476 = vmul.f32 %v1298, %v1444
        %v1477 = vmul.f32 %v1300, %v1445
        %v1478 = vmul.f32 %v1302, %v1446
        %v1479 = vmul.f32 %v1304, %v1447
        %v1480 = vmul.f32 %v1306, %v1448
        %v1481 = vmul.f32 %v1308, %v1449
        %v1482 = vmul.f32 %v1310, %v1450
        %v1483 = vmul.f32 %v1312, %v1451
        %v1484 = vmul.f32 %v1314, %v1452
        %v1485 = vmul.f32 %v1316, %v1453
        %v1486 = vmul.f32 %v1318, %v1454
        %v1487 = vmul.f32 %v1320, %v1455
        %v1488 = vmul.f32 %v1322, %v1456
        %v1489 = vmul.f32 %v1324, %v1457
        %v1490 = vmul.f32 %v1326, %v1458
        %v1491 = vmul.f32 %v1328, %v1459
        %v1492 = vmul.f32 %v1330, %v1460
        %v1493 = vmul.f32 %v1332, %v1461
        %v1494 = vmul.f32 %v1334, %v1462
        %v1495 = vld [vmem:[%s295] sm:$0xf]
        %v1496 = vld [vmem:[%s295 + $0x4] sm:$0xf]
        %v1497 = vld [vmem:[%s295 + $0x8] sm:$0xf]
        %v1498 = vld [vmem:[%s295 + $0xc] sm:$0xf]
        %v1499 = vld [vmem:[%s295 + $0x10] sm:$0xf]
        %v1500 = vld [vmem:[%s295 + $0x14] sm:$0xf]
        %v1501 = vld [vmem:[%s295 + $0x18] sm:$0xf]
        %v1502 = vld [vmem:[%s295 + $0x1c] sm:$0xf]
        %v1503 = vld [vmem:[%s295 + $0x20] sm:$0xf]
        %v1504 = vld [vmem:[%s295 + $0x24] sm:$0xf]
        %v1505 = vld [vmem:[%s295 + $0x28] sm:$0xf]
        %v1506 = vld [vmem:[%s295 + $0x2c] sm:$0xf]
        %v1507 = vld [vmem:[%s295 + $0x30] sm:$0xf]
        %v1508 = vld [vmem:[%s295 + $0x34] sm:$0xf]
        %v1509 = vld [vmem:[%s295 + $0x38] sm:$0xf]
        %v1510 = vld [vmem:[%s295 + $0x3c] sm:$0xf]
        %v1511 = vld [vmem:[%s295 + $0x40] sm:$0xf]
        %v1512 = vld [vmem:[%s295 + $0x44] sm:$0xf]
        %v1513 = vld [vmem:[%s295 + $0x48] sm:$0xf]
        %v1514 = vld [vmem:[%s295 + $0x4c] sm:$0xf]
        %v1515 = vld [vmem:[%s295 + $0x50] sm:$0xf]
        %v1516 = vld [vmem:[%s295 + $0x54] sm:$0xf]
        %v1517 = vld [vmem:[%s295 + $0x58] sm:$0xf]
        %v1518 = vld [vmem:[%s295 + $0x5c] sm:$0xf]
        %v1519 = vld [vmem:[%s295 + $0x60] sm:$0xf]
        %v1520 = vld [vmem:[%s295 + $0x64] sm:$0xf]
        %v1521 = vld [vmem:[%s295 + $0x68] sm:$0xf]
        %v1522 = vld [vmem:[%s295 + $0x6c] sm:$0xf]
        %v1523 = vld [vmem:[%s295 + $0x70] sm:$0xf]
        %v1524 = vld [vmem:[%s295 + $0x74] sm:$0xf]
        %v1525 = vld [vmem:[%s295 + $0x78] sm:$0xf]
        %v1526 = vld [vmem:[%s295 + $0x7c] sm:$0xf]
        %v1527 = vunpack.c.l.bf16 %v1495
        %v1528 = vunpack.c.l.bf16 %v1496
        %v1529 = vunpack.c.l.bf16 %v1497
        %v1530 = vunpack.c.l.bf16 %v1498
        %v1531 = vunpack.c.l.bf16 %v1499
        %v1532 = vunpack.c.l.bf16 %v1500
        %v1533 = vunpack.c.l.bf16 %v1501
        %v1534 = vunpack.c.l.bf16 %v1502
        %v1535 = vunpack.c.l.bf16 %v1503
        %v1536 = vunpack.c.l.bf16 %v1504
        %v1537 = vunpack.c.l.bf16 %v1505
        %v1538 = vunpack.c.l.bf16 %v1506
        %v1539 = vunpack.c.l.bf16 %v1507
        %v1540 = vunpack.c.l.bf16 %v1508
        %v1541 = vunpack.c.l.bf16 %v1509
        %v1542 = vunpack.c.l.bf16 %v1510
        %v1543 = vunpack.c.l.bf16 %v1511
        %v1544 = vunpack.c.l.bf16 %v1512
        %v1545 = vunpack.c.l.bf16 %v1513
        %v1546 = vunpack.c.l.bf16 %v1514
        %v1547 = vunpack.c.l.bf16 %v1515
        %v1548 = vunpack.c.l.bf16 %v1516
        %v1549 = vunpack.c.l.bf16 %v1517
        %v1550 = vunpack.c.l.bf16 %v1518
        %v1551 = vunpack.c.l.bf16 %v1519
        %v1552 = vunpack.c.l.bf16 %v1520
        %v1553 = vunpack.c.l.bf16 %v1521
        %v1554 = vunpack.c.l.bf16 %v1522
        %v1555 = vunpack.c.l.bf16 %v1523
        %v1556 = vunpack.c.l.bf16 %v1524
        %v1557 = vunpack.c.l.bf16 %v1525
        %v1558 = vunpack.c.l.bf16 %v1526
        %v1559 = vmul.f32 %v1463, %v1527
        %v1560 = vmul.f32 %v1464, %v1528
        %v1561 = vmul.f32 %v1465, %v1529
        %v1562 = vmul.f32 %v1466, %v1530
        %v1563 = vmul.f32 %v1467, %v1531
        %v1564 = vmul.f32 %v1468, %v1532
        %v1565 = vmul.f32 %v1469, %v1533
        %v1566 = vmul.f32 %v1470, %v1534
        %v1567 = vmul.f32 %v1471, %v1535
        %v1568 = vmul.f32 %v1472, %v1536
        %v1569 = vmul.f32 %v1473, %v1537
        %v1570 = vmul.f32 %v1474, %v1538
        %v1571 = vmul.f32 %v1475, %v1539
        %v1572 = vmul.f32 %v1476, %v1540
        %v1573 = vmul.f32 %v1477, %v1541
        %v1574 = vmul.f32 %v1478, %v1542
        %v1575 = vmul.f32 %v1479, %v1543
        %v1576 = vmul.f32 %v1480, %v1544
        %v1577 = vmul.f32 %v1481, %v1545
        %v1578 = vmul.f32 %v1482, %v1546
        %v1579 = vmul.f32 %v1483, %v1547
        %v1580 = vmul.f32 %v1484, %v1548
        %v1581 = vmul.f32 %v1485, %v1549
        %v1582 = vmul.f32 %v1486, %v1550
        %v1583 = vmul.f32 %v1487, %v1551
        %v1584 = vmul.f32 %v1488, %v1552
        %v1585 = vmul.f32 %v1489, %v1553
        %v1586 = vmul.f32 %v1490, %v1554
        %v1587 = vmul.f32 %v1491, %v1555
        %v1588 = vmul.f32 %v1492, %v1556
        %v1589 = vmul.f32 %v1493, %v1557
        %v1590 = vmul.f32 %v1494, %v1558
        %1591 = vadd.xlane.f32.xlu0 %v1559
        %v1592 = vpop.xlane.xlu0 %1591
        %1593 = vadd.xlane.f32.xlu0 %v1560
        %v1594 = vpop.xlane.xlu0 %1593
        %1595 = vadd.xlane.f32.xlu0 %v1561
        %v1596 = vpop.xlane.xlu0 %1595
        %1597 = vadd.xlane.f32.xlu0 %v1562
        %v1598 = vpop.xlane.xlu0 %1597
        %1599 = vadd.xlane.f32.xlu0 %v1563
        %v1600 = vpop.xlane.xlu0 %1599
        %1601 = vadd.xlane.f32.xlu0 %v1564
        %v1602 = vpop.xlane.xlu0 %1601
        %1603 = vadd.xlane.f32.xlu0 %v1565
        %v1604 = vpop.xlane.xlu0 %1603
        %1605 = vadd.xlane.f32.xlu0 %v1566
        %v1606 = vpop.xlane.xlu0 %1605
        %1607 = vadd.xlane.f32.xlu0 %v1567
        %v1608 = vpop.xlane.xlu0 %1607
        %1609 = vadd.xlane.f32.xlu0 %v1568
        %v1610 = vpop.xlane.xlu0 %1609
        %1611 = vadd.xlane.f32.xlu0 %v1569
        %v1612 = vpop.xlane.xlu0 %1611
        %1613 = vadd.xlane.f32.xlu0 %v1570
        %v1614 = vpop.xlane.xlu0 %1613
        %1615 = vadd.xlane.f32.xlu0 %v1571
        %v1616 = vpop.xlane.xlu0 %1615
        %1617 = vadd.xlane.f32.xlu0 %v1572
        %v1618 = vpop.xlane.xlu0 %1617
        %1619 = vadd.xlane.f32.xlu0 %v1573
        %v1620 = vpop.xlane.xlu0 %1619
        %1621 = vadd.xlane.f32.xlu0 %v1574
        %v1622 = vpop.xlane.xlu0 %1621
        %1623 = vadd.xlane.f32.xlu0 %v1575
        %v1624 = vpop.xlane.xlu0 %1623
        %1625 = vadd.xlane.f32.xlu0 %v1576
        %v1626 = vpop.xlane.xlu0 %1625
        %1627 = vadd.xlane.f32.xlu0 %v1577
        %v1628 = vpop.xlane.xlu0 %1627
        %1629 = vadd.xlane.f32.xlu0 %v1578
        %v1630 = vpop.xlane.xlu0 %1629
        %1631 = vadd.xlane.f32.xlu0 %v1579
        %v1632 = vpop.xlane.xlu0 %1631
        %1633 = vadd.xlane.f32.xlu0 %v1580
        %v1634 = vpop.xlane.xlu0 %1633
        %1635 = vadd.xlane.f32.xlu0 %v1581
        %v1636 = vpop.xlane.xlu0 %1635
        %1637 = vadd.xlane.f32.xlu0 %v1582
        %v1638 = vpop.xlane.xlu0 %1637
        %1639 = vadd.xlane.f32.xlu0 %v1583
        %v1640 = vpop.xlane.xlu0 %1639
        %1641 = vadd.xlane.f32.xlu0 %v1584
        %v1642 = vpop.xlane.xlu0 %1641
        %1643 = vadd.xlane.f32.xlu0 %v1585
        %v1644 = vpop.xlane.xlu0 %1643
        %1645 = vadd.xlane.f32.xlu0 %v1586
        %v1646 = vpop.xlane.xlu0 %1645
        %1647 = vadd.xlane.f32.xlu0 %v1587
        %v1648 = vpop.xlane.xlu0 %1647
        %1649 = vadd.xlane.f32.xlu0 %v1588
        %v1650 = vpop.xlane.xlu0 %1649
        %1651 = vadd.xlane.f32.xlu0 %v1589
        %v1652 = vpop.xlane.xlu0 %1651
        %1653 = vadd.xlane.f32.xlu0 %v1590
        %v1654 = vpop.xlane.xlu0 %1653
        %vm1655 = vcmask 7168
        %1656 = vst.msk [vmem:[%s337] sm:$0xff] %vm1655, %v1592
        %1657 = vst.msk [vmem:[%s337 + $0x8] sm:$0xff] %vm1655, %v1594
        %1658 = vst.msk [vmem:[%s337 + $0x10] sm:$0xff] %vm1655, %v1596
        %1659 = vst.msk [vmem:[%s337 + $0x18] sm:$0xff] %vm1655, %v1598
        %1660 = vst.msk [vmem:[%s337 + $0x20] sm:$0xff] %vm1655, %v1600
        %1661 = vst.msk [vmem:[%s337 + $0x28] sm:$0xff] %vm1655, %v1602
        %1662 = vst.msk [vmem:[%s337 + $0x30] sm:$0xff] %vm1655, %v1604
        %1663 = vst.msk [vmem:[%s337 + $0x38] sm:$0xff] %vm1655, %v1606
        %1664 = vst.msk [vmem:[%s337 + $0x40] sm:$0xff] %vm1655, %v1608
        %1665 = vst.msk [vmem:[%s337 + $0x48] sm:$0xff] %vm1655, %v1610
        %1666 = vst.msk [vmem:[%s337 + $0x50] sm:$0xff] %vm1655, %v1612
        %1667 = vst.msk [vmem:[%s337 + $0x58] sm:$0xff] %vm1655, %v1614
        %1668 = vst.msk [vmem:[%s337 + $0x60] sm:$0xff] %vm1655, %v1616
        %1669 = vst.msk [vmem:[%s337 + $0x68] sm:$0xff] %vm1655, %v1618
        %1670 = vst.msk [vmem:[%s337 + $0x70] sm:$0xff] %vm1655, %v1620
        %1671 = vst.msk [vmem:[%s337 + $0x78] sm:$0xff] %vm1655, %v1622
        %1672 = vst.msk [vmem:[%s337 + $0x80] sm:$0xff] %vm1655, %v1624
        %1673 = vst.msk [vmem:[%s337 + $0x88] sm:$0xff] %vm1655, %v1626
        %1674 = vst.msk [vmem:[%s337 + $0x90] sm:$0xff] %vm1655, %v1628
        %1675 = vst.msk [vmem:[%s337 + $0x98] sm:$0xff] %vm1655, %v1630
        %1676 = vst.msk [vmem:[%s337 + $0xa0] sm:$0xff] %vm1655, %v1632
        %1677 = vst.msk [vmem:[%s337 + $0xa8] sm:$0xff] %vm1655, %v1634
        %1678 = vst.msk [vmem:[%s337 + $0xb0] sm:$0xff] %vm1655, %v1636
        %1679 = vst.msk [vmem:[%s337 + $0xb8] sm:$0xff] %vm1655, %v1638
        %1680 = vst.msk [vmem:[%s337 + $0xc0] sm:$0xff] %vm1655, %v1640
        %1681 = vst.msk [vmem:[%s337 + $0xc8] sm:$0xff] %vm1655, %v1642
        %1682 = vst.msk [vmem:[%s337 + $0xd0] sm:$0xff] %vm1655, %v1644
        %1683 = vst.msk [vmem:[%s337 + $0xd8] sm:$0xff] %vm1655, %v1646
        %1684 = vst.msk [vmem:[%s337 + $0xe0] sm:$0xff] %vm1655, %v1648
        %1685 = vst.msk [vmem:[%s337 + $0xe8] sm:$0xff] %vm1655, %v1650
        %1686 = vst.msk [vmem:[%s337 + $0xf0] sm:$0xff] %vm1655, %v1652
        %1687 = vst.msk [vmem:[%s337 + $0xf8] sm:$0xff] %vm1655, %v1654
        %s1688 = scalar_lea.vmem %s295, 128 [#allocation7]
        %v1689 = vld [vmem:[%s1688] sm:$0xf]
        %v1690 = vld [vmem:[%s1688 + $0x4] sm:$0xf]
        %v1691 = vld [vmem:[%s1688 + $0x8] sm:$0xf]
        %v1692 = vld [vmem:[%s1688 + $0xc] sm:$0xf]
        %v1693 = vld [vmem:[%s1688 + $0x10] sm:$0xf]
        %v1694 = vld [vmem:[%s1688 + $0x14] sm:$0xf]
        %v1695 = vld [vmem:[%s1688 + $0x18] sm:$0xf]
        %v1696 = vld [vmem:[%s1688 + $0x1c] sm:$0xf]
        %v1697 = vld [vmem:[%s1688 + $0x20] sm:$0xf]
        %v1698 = vld [vmem:[%s1688 + $0x24] sm:$0xf]
        %v1699 = vld [vmem:[%s1688 + $0x28] sm:$0xf]
        %v1700 = vld [vmem:[%s1688 + $0x2c] sm:$0xf]
        %v1701 = vld [vmem:[%s1688 + $0x30] sm:$0xf]
        %v1702 = vld [vmem:[%s1688 + $0x34] sm:$0xf]
        %v1703 = vld [vmem:[%s1688 + $0x38] sm:$0xf]
        %v1704 = vld [vmem:[%s1688 + $0x3c] sm:$0xf]
        %v1705 = vld [vmem:[%s1688 + $0x40] sm:$0xf]
        %v1706 = vld [vmem:[%s1688 + $0x44] sm:$0xf]
        %v1707 = vld [vmem:[%s1688 + $0x48] sm:$0xf]
        %v1708 = vld [vmem:[%s1688 + $0x4c] sm:$0xf]
        %v1709 = vld [vmem:[%s1688 + $0x50] sm:$0xf]
        %v1710 = vld [vmem:[%s1688 + $0x54] sm:$0xf]
        %v1711 = vld [vmem:[%s1688 + $0x58] sm:$0xf]
        %v1712 = vld [vmem:[%s1688 + $0x5c] sm:$0xf]
        %v1713 = vld [vmem:[%s1688 + $0x60] sm:$0xf]
        %v1714 = vld [vmem:[%s1688 + $0x64] sm:$0xf]
        %v1715 = vld [vmem:[%s1688 + $0x68] sm:$0xf]
        %v1716 = vld [vmem:[%s1688 + $0x6c] sm:$0xf]
        %v1717 = vld [vmem:[%s1688 + $0x70] sm:$0xf]
        %v1718 = vld [vmem:[%s1688 + $0x74] sm:$0xf]
        %v1719 = vld [vmem:[%s1688 + $0x78] sm:$0xf]
        %v1720 = vld [vmem:[%s1688 + $0x7c] sm:$0xf]
        %v1721 = vunpack.c.l.bf16 %v1689
        %v1722 = vunpack.c.l.bf16 %v1690
        %v1723 = vunpack.c.l.bf16 %v1691
        %v1724 = vunpack.c.l.bf16 %v1692
        %v1725 = vunpack.c.l.bf16 %v1693
        %v1726 = vunpack.c.l.bf16 %v1694
        %v1727 = vunpack.c.l.bf16 %v1695
        %v1728 = vunpack.c.l.bf16 %v1696
        %v1729 = vunpack.c.l.bf16 %v1697
        %v1730 = vunpack.c.l.bf16 %v1698
        %v1731 = vunpack.c.l.bf16 %v1699
        %v1732 = vunpack.c.l.bf16 %v1700
        %v1733 = vunpack.c.l.bf16 %v1701
        %v1734 = vunpack.c.l.bf16 %v1702
        %v1735 = vunpack.c.l.bf16 %v1703
        %v1736 = vunpack.c.l.bf16 %v1704
        %v1737 = vunpack.c.l.bf16 %v1705
        %v1738 = vunpack.c.l.bf16 %v1706
        %v1739 = vunpack.c.l.bf16 %v1707
        %v1740 = vunpack.c.l.bf16 %v1708
        %v1741 = vunpack.c.l.bf16 %v1709
        %v1742 = vunpack.c.l.bf16 %v1710
        %v1743 = vunpack.c.l.bf16 %v1711
        %v1744 = vunpack.c.l.bf16 %v1712
        %v1745 = vunpack.c.l.bf16 %v1713
        %v1746 = vunpack.c.l.bf16 %v1714
        %v1747 = vunpack.c.l.bf16 %v1715
        %v1748 = vunpack.c.l.bf16 %v1716
        %v1749 = vunpack.c.l.bf16 %v1717
        %v1750 = vunpack.c.l.bf16 %v1718
        %v1751 = vunpack.c.l.bf16 %v1719
        %v1752 = vunpack.c.l.bf16 %v1720
        %v1753 = vmul.f32 %v1463, %v1721
        %v1754 = vmul.f32 %v1464, %v1722
        %v1755 = vmul.f32 %v1465, %v1723
        %v1756 = vmul.f32 %v1466, %v1724
        %v1757 = vmul.f32 %v1467, %v1725
        %v1758 = vmul.f32 %v1468, %v1726
        %v1759 = vmul.f32 %v1469, %v1727
        %v1760 = vmul.f32 %v1470, %v1728
        %v1761 = vmul.f32 %v1471, %v1729
        %v1762 = vmul.f32 %v1472, %v1730
        %v1763 = vmul.f32 %v1473, %v1731
        %v1764 = vmul.f32 %v1474, %v1732
        %v1765 = vmul.f32 %v1475, %v1733
        %v1766 = vmul.f32 %v1476, %v1734
        %v1767 = vmul.f32 %v1477, %v1735
        %v1768 = vmul.f32 %v1478, %v1736
        %v1769 = vmul.f32 %v1479, %v1737
        %v1770 = vmul.f32 %v1480, %v1738
        %v1771 = vmul.f32 %v1481, %v1739
        %v1772 = vmul.f32 %v1482, %v1740
        %v1773 = vmul.f32 %v1483, %v1741
        %v1774 = vmul.f32 %v1484, %v1742
        %v1775 = vmul.f32 %v1485, %v1743
        %v1776 = vmul.f32 %v1486, %v1744
        %v1777 = vmul.f32 %v1487, %v1745
        %v1778 = vmul.f32 %v1488, %v1746
        %v1779 = vmul.f32 %v1489, %v1747
        %v1780 = vmul.f32 %v1490, %v1748
        %v1781 = vmul.f32 %v1491, %v1749
        %v1782 = vmul.f32 %v1492, %v1750
        %v1783 = vmul.f32 %v1493, %v1751
        %v1784 = vmul.f32 %v1494, %v1752
        %1785 = vadd.xlane.f32.xlu0 %v1753
        %v1786 = vpop.xlane.xlu0 %1785
        %1787 = vadd.xlane.f32.xlu0 %v1754
        %v1788 = vpop.xlane.xlu0 %1787
        %1789 = vadd.xlane.f32.xlu0 %v1755
        %v1790 = vpop.xlane.xlu0 %1789
        %1791 = vadd.xlane.f32.xlu0 %v1756
        %v1792 = vpop.xlane.xlu0 %1791
        %1793 = vadd.xlane.f32.xlu0 %v1757
        %v1794 = vpop.xlane.xlu0 %1793
        %1795 = vadd.xlane.f32.xlu0 %v1758
        %v1796 = vpop.xlane.xlu0 %1795
        %1797 = vadd.xlane.f32.xlu0 %v1759
        %v1798 = vpop.xlane.xlu0 %1797
        %1799 = vadd.xlane.f32.xlu0 %v1760
        %v1800 = vpop.xlane.xlu0 %1799
        %1801 = vadd.xlane.f32.xlu0 %v1761
        %v1802 = vpop.xlane.xlu0 %1801
        %1803 = vadd.xlane.f32.xlu0 %v1762
        %v1804 = vpop.xlane.xlu0 %1803
        %1805 = vadd.xlane.f32.xlu0 %v1763
        %v1806 = vpop.xlane.xlu0 %1805
        %1807 = vadd.xlane.f32.xlu0 %v1764
        %v1808 = vpop.xlane.xlu0 %1807
        %1809 = vadd.xlane.f32.xlu0 %v1765
        %v1810 = vpop.xlane.xlu0 %1809
        %1811 = vadd.xlane.f32.xlu0 %v1766
        %v1812 = vpop.xlane.xlu0 %1811
        %1813 = vadd.xlane.f32.xlu0 %v1767
        %v1814 = vpop.xlane.xlu0 %1813
        %1815 = vadd.xlane.f32.xlu0 %v1768
        %v1816 = vpop.xlane.xlu0 %1815
        %1817 = vadd.xlane.f32.xlu0 %v1769
        %v1818 = vpop.xlane.xlu0 %1817
        %1819 = vadd.xlane.f32.xlu0 %v1770
        %v1820 = vpop.xlane.xlu0 %1819
        %1821 = vadd.xlane.f32.xlu0 %v1771
        %v1822 = vpop.xlane.xlu0 %1821
        %1823 = vadd.xlane.f32.xlu0 %v1772
        %v1824 = vpop.xlane.xlu0 %1823
        %1825 = vadd.xlane.f32.xlu0 %v1773
        %v1826 = vpop.xlane.xlu0 %1825
        %1827 = vadd.xlane.f32.xlu0 %v1774
        %v1828 = vpop.xlane.xlu0 %1827
        %1829 = vadd.xlane.f32.xlu0 %v1775
        %v1830 = vpop.xlane.xlu0 %1829
        %1831 = vadd.xlane.f32.xlu0 %v1776
        %v1832 = vpop.xlane.xlu0 %1831
        %1833 = vadd.xlane.f32.xlu0 %v1777
        %v1834 = vpop.xlane.xlu0 %1833
        %1835 = vadd.xlane.f32.xlu0 %v1778
        %v1836 = vpop.xlane.xlu0 %1835
        %1837 = vadd.xlane.f32.xlu0 %v1779
        %v1838 = vpop.xlane.xlu0 %1837
        %1839 = vadd.xlane.f32.xlu0 %v1780
        %v1840 = vpop.xlane.xlu0 %1839
        %1841 = vadd.xlane.f32.xlu0 %v1781
        %v1842 = vpop.xlane.xlu0 %1841
        %1843 = vadd.xlane.f32.xlu0 %v1782
        %v1844 = vpop.xlane.xlu0 %1843
        %1845 = vadd.xlane.f32.xlu0 %v1783
        %v1846 = vpop.xlane.xlu0 %1845
        %1847 = vadd.xlane.f32.xlu0 %v1784
        %v1848 = vpop.xlane.xlu0 %1847
        %vm1849 = vcmask 15368
        %1850 = vst.msk [vmem:[%s337] sm:$0xff] %vm1849, %v1786
        %1851 = vst.msk [vmem:[%s337 + $0x8] sm:$0xff] %vm1849, %v1788
        %1852 = vst.msk [vmem:[%s337 + $0x10] sm:$0xff] %vm1849, %v1790
        %1853 = vst.msk [vmem:[%s337 + $0x18] sm:$0xff] %vm1849, %v1792
        %1854 = vst.msk [vmem:[%s337 + $0x20] sm:$0xff] %vm1849, %v1794
        %1855 = vst.msk [vmem:[%s337 + $0x28] sm:$0xff] %vm1849, %v1796
        %1856 = vst.msk [vmem:[%s337 + $0x30] sm:$0xff] %vm1849, %v1798
        %1857 = vst.msk [vmem:[%s337 + $0x38] sm:$0xff] %vm1849, %v1800
        %1858 = vst.msk [vmem:[%s337 + $0x40] sm:$0xff] %vm1849, %v1802
        %1859 = vst.msk [vmem:[%s337 + $0x48] sm:$0xff] %vm1849, %v1804
        %1860 = vst.msk [vmem:[%s337 + $0x50] sm:$0xff] %vm1849, %v1806
        %1861 = vst.msk [vmem:[%s337 + $0x58] sm:$0xff] %vm1849, %v1808
        %1862 = vst.msk [vmem:[%s337 + $0x60] sm:$0xff] %vm1849, %v1810
        %1863 = vst.msk [vmem:[%s337 + $0x68] sm:$0xff] %vm1849, %v1812
        %1864 = vst.msk [vmem:[%s337 + $0x70] sm:$0xff] %vm1849, %v1814
        %1865 = vst.msk [vmem:[%s337 + $0x78] sm:$0xff] %vm1849, %v1816
        %1866 = vst.msk [vmem:[%s337 + $0x80] sm:$0xff] %vm1849, %v1818
        %1867 = vst.msk [vmem:[%s337 + $0x88] sm:$0xff] %vm1849, %v1820
        %1868 = vst.msk [vmem:[%s337 + $0x90] sm:$0xff] %vm1849, %v1822
        %1869 = vst.msk [vmem:[%s337 + $0x98] sm:$0xff] %vm1849, %v1824
        %1870 = vst.msk [vmem:[%s337 + $0xa0] sm:$0xff] %vm1849, %v1826
        %1871 = vst.msk [vmem:[%s337 + $0xa8] sm:$0xff] %vm1849, %v1828
        %1872 = vst.msk [vmem:[%s337 + $0xb0] sm:$0xff] %vm1849, %v1830
        %1873 = vst.msk [vmem:[%s337 + $0xb8] sm:$0xff] %vm1849, %v1832
        %1874 = vst.msk [vmem:[%s337 + $0xc0] sm:$0xff] %vm1849, %v1834
        %1875 = vst.msk [vmem:[%s337 + $0xc8] sm:$0xff] %vm1849, %v1836
        %1876 = vst.msk [vmem:[%s337 + $0xd0] sm:$0xff] %vm1849, %v1838
        %1877 = vst.msk [vmem:[%s337 + $0xd8] sm:$0xff] %vm1849, %v1840
        %1878 = vst.msk [vmem:[%s337 + $0xe0] sm:$0xff] %vm1849, %v1842
        %1879 = vst.msk [vmem:[%s337 + $0xe8] sm:$0xff] %vm1849, %v1844
        %1880 = vst.msk [vmem:[%s337 + $0xf0] sm:$0xff] %vm1849, %v1846
        %1881 = vst.msk [vmem:[%s337 + $0xf8] sm:$0xff] %vm1849, %v1848
        %s1882 = scalar_lea.vmem %s295, 256 [#allocation7]
        %v1883 = vld [vmem:[%s1882] sm:$0xf]
        %v1884 = vld [vmem:[%s1882 + $0x4] sm:$0xf]
        %v1885 = vld [vmem:[%s1882 + $0x8] sm:$0xf]
        %v1886 = vld [vmem:[%s1882 + $0xc] sm:$0xf]
        %v1887 = vld [vmem:[%s1882 + $0x10] sm:$0xf]
        %v1888 = vld [vmem:[%s1882 + $0x14] sm:$0xf]
        %v1889 = vld [vmem:[%s1882 + $0x18] sm:$0xf]
        %v1890 = vld [vmem:[%s1882 + $0x1c] sm:$0xf]
        %v1891 = vld [vmem:[%s1882 + $0x20] sm:$0xf]
        %v1892 = vld [vmem:[%s1882 + $0x24] sm:$0xf]
        %v1893 = vld [vmem:[%s1882 + $0x28] sm:$0xf]
        %v1894 = vld [vmem:[%s1882 + $0x2c] sm:$0xf]
        %v1895 = vld [vmem:[%s1882 + $0x30] sm:$0xf]
        %v1896 = vld [vmem:[%s1882 + $0x34] sm:$0xf]
        %v1897 = vld [vmem:[%s1882 + $0x38] sm:$0xf]
        %v1898 = vld [vmem:[%s1882 + $0x3c] sm:$0xf]
        %v1899 = vld [vmem:[%s1882 + $0x40] sm:$0xf]
        %v1900 = vld [vmem:[%s1882 + $0x44] sm:$0xf]
        %v1901 = vld [vmem:[%s1882 + $0x48] sm:$0xf]
        %v1902 = vld [vmem:[%s1882 + $0x4c] sm:$0xf]
        %v1903 = vld [vmem:[%s1882 + $0x50] sm:$0xf]
        %v1904 = vld [vmem:[%s1882 + $0x54] sm:$0xf]
        %v1905 = vld [vmem:[%s1882 + $0x58] sm:$0xf]
        %v1906 = vld [vmem:[%s1882 + $0x5c] sm:$0xf]
        %v1907 = vld [vmem:[%s1882 + $0x60] sm:$0xf]
        %v1908 = vld [vmem:[%s1882 + $0x64] sm:$0xf]
        %v1909 = vld [vmem:[%s1882 + $0x68] sm:$0xf]
        %v1910 = vld [vmem:[%s1882 + $0x6c] sm:$0xf]
        %v1911 = vld [vmem:[%s1882 + $0x70] sm:$0xf]
        %v1912 = vld [vmem:[%s1882 + $0x74] sm:$0xf]
        %v1913 = vld [vmem:[%s1882 + $0x78] sm:$0xf]
        %v1914 = vld [vmem:[%s1882 + $0x7c] sm:$0xf]
        %v1915 = vunpack.c.l.bf16 %v1883
        %v1916 = vunpack.c.l.bf16 %v1884
        %v1917 = vunpack.c.l.bf16 %v1885
        %v1918 = vunpack.c.l.bf16 %v1886
        %v1919 = vunpack.c.l.bf16 %v1887
        %v1920 = vunpack.c.l.bf16 %v1888
        %v1921 = vunpack.c.l.bf16 %v1889
        %v1922 = vunpack.c.l.bf16 %v1890
        %v1923 = vunpack.c.l.bf16 %v1891
        %v1924 = vunpack.c.l.bf16 %v1892
        %v1925 = vunpack.c.l.bf16 %v1893
        %v1926 = vunpack.c.l.bf16 %v1894
        %v1927 = vunpack.c.l.bf16 %v1895
        %v1928 = vunpack.c.l.bf16 %v1896
        %v1929 = vunpack.c.l.bf16 %v1897
        %v1930 = vunpack.c.l.bf16 %v1898
        %v1931 = vunpack.c.l.bf16 %v1899
        %v1932 = vunpack.c.l.bf16 %v1900
        %v1933 = vunpack.c.l.bf16 %v1901
        %v1934 = vunpack.c.l.bf16 %v1902
        %v1935 = vunpack.c.l.bf16 %v1903
        %v1936 = vunpack.c.l.bf16 %v1904
        %v1937 = vunpack.c.l.bf16 %v1905
        %v1938 = vunpack.c.l.bf16 %v1906
        %v1939 = vunpack.c.l.bf16 %v1907
        %v1940 = vunpack.c.l.bf16 %v1908
        %v1941 = vunpack.c.l.bf16 %v1909
        %v1942 = vunpack.c.l.bf16 %v1910
        %v1943 = vunpack.c.l.bf16 %v1911
        %v1944 = vunpack.c.l.bf16 %v1912
        %v1945 = vunpack.c.l.bf16 %v1913
        %v1946 = vunpack.c.l.bf16 %v1914
        %v1947 = vmul.f32 %v1463, %v1915
        %v1948 = vmul.f32 %v1464, %v1916
        %v1949 = vmul.f32 %v1465, %v1917
        %v1950 = vmul.f32 %v1466, %v1918
        %v1951 = vmul.f32 %v1467, %v1919
        %v1952 = vmul.f32 %v1468, %v1920
        %v1953 = vmul.f32 %v1469, %v1921
        %v1954 = vmul.f32 %v1470, %v1922
        %v1955 = vmul.f32 %v1471, %v1923
        %v1956 = vmul.f32 %v1472, %v1924
        %v1957 = vmul.f32 %v1473, %v1925
        %v1958 = vmul.f32 %v1474, %v1926
        %v1959 = vmul.f32 %v1475, %v1927
        %v1960 = vmul.f32 %v1476, %v1928
        %v1961 = vmul.f32 %v1477, %v1929
        %v1962 = vmul.f32 %v1478, %v1930
        %v1963 = vmul.f32 %v1479, %v1931
        %v1964 = vmul.f32 %v1480, %v1932
        %v1965 = vmul.f32 %v1481, %v1933
        %v1966 = vmul.f32 %v1482, %v1934
        %v1967 = vmul.f32 %v1483, %v1935
        %v1968 = vmul.f32 %v1484, %v1936
        %v1969 = vmul.f32 %v1485, %v1937
        %v1970 = vmul.f32 %v1486, %v1938
        %v1971 = vmul.f32 %v1487, %v1939
        %v1972 = vmul.f32 %v1488, %v1940
        %v1973 = vmul.f32 %v1489, %v1941
        %v1974 = vmul.f32 %v1490, %v1942
        %v1975 = vmul.f32 %v1491, %v1943
        %v1976 = vmul.f32 %v1492, %v1944
        %v1977 = vmul.f32 %v1493, %v1945
        %v1978 = vmul.f32 %v1494, %v1946
        %1979 = vadd.xlane.f32.xlu0 %v1947
        %v1980 = vpop.xlane.xlu0 %1979
        %1981 = vadd.xlane.f32.xlu0 %v1948
        %v1982 = vpop.xlane.xlu0 %1981
        %1983 = vadd.xlane.f32.xlu0 %v1949
        %v1984 = vpop.xlane.xlu0 %1983
        %1985 = vadd.xlane.f32.xlu0 %v1950
        %v1986 = vpop.xlane.xlu0 %1985
        %1987 = vadd.xlane.f32.xlu0 %v1951
        %v1988 = vpop.xlane.xlu0 %1987
        %1989 = vadd.xlane.f32.xlu0 %v1952
        %v1990 = vpop.xlane.xlu0 %1989
        %1991 = vadd.xlane.f32.xlu0 %v1953
        %v1992 = vpop.xlane.xlu0 %1991
        %1993 = vadd.xlane.f32.xlu0 %v1954
        %v1994 = vpop.xlane.xlu0 %1993
        %1995 = vadd.xlane.f32.xlu0 %v1955
        %v1996 = vpop.xlane.xlu0 %1995
        %1997 = vadd.xlane.f32.xlu0 %v1956
        %v1998 = vpop.xlane.xlu0 %1997
        %1999 = vadd.xlane.f32.xlu0 %v1957
        %v2000 = vpop.xlane.xlu0 %1999
        %2001 = vadd.xlane.f32.xlu0 %v1958
        %v2002 = vpop.xlane.xlu0 %2001
        %2003 = vadd.xlane.f32.xlu0 %v1959
        %v2004 = vpop.xlane.xlu0 %2003
        %2005 = vadd.xlane.f32.xlu0 %v1960
        %v2006 = vpop.xlane.xlu0 %2005
        %2007 = vadd.xlane.f32.xlu0 %v1961
        %v2008 = vpop.xlane.xlu0 %2007
        %2009 = vadd.xlane.f32.xlu0 %v1962
        %v2010 = vpop.xlane.xlu0 %2009
        %2011 = vadd.xlane.f32.xlu0 %v1963
        %v2012 = vpop.xlane.xlu0 %2011
        %2013 = vadd.xlane.f32.xlu0 %v1964
        %v2014 = vpop.xlane.xlu0 %2013
        %2015 = vadd.xlane.f32.xlu0 %v1965
        %v2016 = vpop.xlane.xlu0 %2015
        %2017 = vadd.xlane.f32.xlu0 %v1966
        %v2018 = vpop.xlane.xlu0 %2017
        %2019 = vadd.xlane.f32.xlu0 %v1967
        %v2020 = vpop.xlane.xlu0 %2019
        %2021 = vadd.xlane.f32.xlu0 %v1968
        %v2022 = vpop.xlane.xlu0 %2021
        %2023 = vadd.xlane.f32.xlu0 %v1969
        %v2024 = vpop.xlane.xlu0 %2023
        %2025 = vadd.xlane.f32.xlu0 %v1970
        %v2026 = vpop.xlane.xlu0 %2025
        %2027 = vadd.xlane.f32.xlu0 %v1971
        %v2028 = vpop.xlane.xlu0 %2027
        %2029 = vadd.xlane.f32.xlu0 %v1972
        %v2030 = vpop.xlane.xlu0 %2029
        %2031 = vadd.xlane.f32.xlu0 %v1973
        %v2032 = vpop.xlane.xlu0 %2031
        %2033 = vadd.xlane.f32.xlu0 %v1974
        %v2034 = vpop.xlane.xlu0 %2033
        %2035 = vadd.xlane.f32.xlu0 %v1975
        %v2036 = vpop.xlane.xlu0 %2035
        %2037 = vadd.xlane.f32.xlu0 %v1976
        %v2038 = vpop.xlane.xlu0 %2037
        %2039 = vadd.xlane.f32.xlu0 %v1977
        %v2040 = vpop.xlane.xlu0 %2039
        %2041 = vadd.xlane.f32.xlu0 %v1978
        %v2042 = vpop.xlane.xlu0 %2041
        %vm2043 = vcmask 23568
        %2044 = vst.msk [vmem:[%s337] sm:$0xff] %vm2043, %v1980
        %2045 = vst.msk [vmem:[%s337 + $0x8] sm:$0xff] %vm2043, %v1982
        %2046 = vst.msk [vmem:[%s337 + $0x10] sm:$0xff] %vm2043, %v1984
        %2047 = vst.msk [vmem:[%s337 + $0x18] sm:$0xff] %vm2043, %v1986
        %2048 = vst.msk [vmem:[%s337 + $0x20] sm:$0xff] %vm2043, %v1988
        %2049 = vst.msk [vmem:[%s337 + $0x28] sm:$0xff] %vm2043, %v1990
        %2050 = vst.msk [vmem:[%s337 + $0x30] sm:$0xff] %vm2043, %v1992
        %2051 = vst.msk [vmem:[%s337 + $0x38] sm:$0xff] %vm2043, %v1994
        %2052 = vst.msk [vmem:[%s337 + $0x40] sm:$0xff] %vm2043, %v1996
        %2053 = vst.msk [vmem:[%s337 + $0x48] sm:$0xff] %vm2043, %v1998
        %2054 = vst.msk [vmem:[%s337 + $0x50] sm:$0xff] %vm2043, %v2000
        %2055 = vst.msk [vmem:[%s337 + $0x58] sm:$0xff] %vm2043, %v2002
        %2056 = vst.msk [vmem:[%s337 + $0x60] sm:$0xff] %vm2043, %v2004
        %2057 = vst.msk [vmem:[%s337 + $0x68] sm:$0xff] %vm2043, %v2006
        %2058 = vst.msk [vmem:[%s337 + $0x70] sm:$0xff] %vm2043, %v2008
        %2059 = vst.msk [vmem:[%s337 + $0x78] sm:$0xff] %vm2043, %v2010
        %2060 = vst.msk [vmem:[%s337 + $0x80] sm:$0xff] %vm2043, %v2012
        %2061 = vst.msk [vmem:[%s337 + $0x88] sm:$0xff] %vm2043, %v2014
        %2062 = vst.msk [vmem:[%s337 + $0x90] sm:$0xff] %vm2043, %v2016
        %2063 = vst.msk [vmem:[%s337 + $0x98] sm:$0xff] %vm2043, %v2018
        %2064 = vst.msk [vmem:[%s337 + $0xa0] sm:$0xff] %vm2043, %v2020
        %2065 = vst.msk [vmem:[%s337 + $0xa8] sm:$0xff] %vm2043, %v2022
        %2066 = vst.msk [vmem:[%s337 + $0xb0] sm:$0xff] %vm2043, %v2024
        %2067 = vst.msk [vmem:[%s337 + $0xb8] sm:$0xff] %vm2043, %v2026
        %2068 = vst.msk [vmem:[%s337 + $0xc0] sm:$0xff] %vm2043, %v2028
        %2069 = vst.msk [vmem:[%s337 + $0xc8] sm:$0xff] %vm2043, %v2030
        %2070 = vst.msk [vmem:[%s337 + $0xd0] sm:$0xff] %vm2043, %v2032
        %2071 = vst.msk [vmem:[%s337 + $0xd8] sm:$0xff] %vm2043, %v2034
        %2072 = vst.msk [vmem:[%s337 + $0xe0] sm:$0xff] %vm2043, %v2036
        %2073 = vst.msk [vmem:[%s337 + $0xe8] sm:$0xff] %vm2043, %v2038
        %2074 = vst.msk [vmem:[%s337 + $0xf0] sm:$0xff] %vm2043, %v2040
        %2075 = vst.msk [vmem:[%s337 + $0xf8] sm:$0xff] %vm2043, %v2042
        %v2076 = vmul.f32 %v1463, %v340
        %v2077 = vmul.f32 %v1464, %v341
        %v2078 = vmul.f32 %v1465, %v342
        %v2079 = vmul.f32 %v1466, %v343
        %v2080 = vmul.f32 %v1467, %v344
        %v2081 = vmul.f32 %v1468, %v345
        %v2082 = vmul.f32 %v1469, %v346
        %v2083 = vmul.f32 %v1470, %v347
        %v2084 = vmul.f32 %v1471, %v348
        %v2085 = vmul.f32 %v1472, %v349
        %v2086 = vmul.f32 %v1473, %v350
        %v2087 = vmul.f32 %v1474, %v351
        %v2088 = vmul.f32 %v1475, %v352
        %v2089 = vmul.f32 %v1476, %v353
        %v2090 = vmul.f32 %v1477, %v354
        %v2091 = vmul.f32 %v1478, %v355
        %v2092 = vmul.f32 %v1479, %v356
        %v2093 = vmul.f32 %v1480, %v357
        %v2094 = vmul.f32 %v1481, %v358
        %v2095 = vmul.f32 %v1482, %v359
        %v2096 = vmul.f32 %v1483, %v360
        %v2097 = vmul.f32 %v1484, %v361
        %v2098 = vmul.f32 %v1485, %v362
        %v2099 = vmul.f32 %v1486, %v363
        %v2100 = vmul.f32 %v1487, %v364
        %v2101 = vmul.f32 %v1488, %v365
        %v2102 = vmul.f32 %v1489, %v366
        %v2103 = vmul.f32 %v1490, %v367
        %v2104 = vmul.f32 %v1491, %v368
        %v2105 = vmul.f32 %v1492, %v369
        %v2106 = vmul.f32 %v1493, %v370
        %v2107 = vmul.f32 %v1494, %v371
        %2108 = vadd.xlane.f32.xlu0 %v2076
        %v2109 = vpop.xlane.xlu0 %2108
        %2110 = vadd.xlane.f32.xlu0 %v2077
        %v2111 = vpop.xlane.xlu0 %2110
        %2112 = vadd.xlane.f32.xlu0 %v2078
        %v2113 = vpop.xlane.xlu0 %2112
        %2114 = vadd.xlane.f32.xlu0 %v2079
        %v2115 = vpop.xlane.xlu0 %2114
        %2116 = vadd.xlane.f32.xlu0 %v2080
        %v2117 = vpop.xlane.xlu0 %2116
        %2118 = vadd.xlane.f32.xlu0 %v2081
        %v2119 = vpop.xlane.xlu0 %2118
        %2120 = vadd.xlane.f32.xlu0 %v2082
        %v2121 = vpop.xlane.xlu0 %2120
        %2122 = vadd.xlane.f32.xlu0 %v2083
        %v2123 = vpop.xlane.xlu0 %2122
        %2124 = vadd.xlane.f32.xlu0 %v2084
        %v2125 = vpop.xlane.xlu0 %2124
        %2126 = vadd.xlane.f32.xlu0 %v2085
        %v2127 = vpop.xlane.xlu0 %2126
        %2128 = vadd.xlane.f32.xlu0 %v2086
        %v2129 = vpop.xlane.xlu0 %2128
        %2130 = vadd.xlane.f32.xlu0 %v2087
        %v2131 = vpop.xlane.xlu0 %2130
        %2132 = vadd.xlane.f32.xlu0 %v2088
        %v2133 = vpop.xlane.xlu0 %2132
        %2134 = vadd.xlane.f32.xlu0 %v2089
        %v2135 = vpop.xlane.xlu0 %2134
        %2136 = vadd.xlane.f32.xlu0 %v2090
        %v2137 = vpop.xlane.xlu0 %2136
        %2138 = vadd.xlane.f32.xlu0 %v2091
        %v2139 = vpop.xlane.xlu0 %2138
        %2140 = vadd.xlane.f32.xlu0 %v2092
        %v2141 = vpop.xlane.xlu0 %2140
        %2142 = vadd.xlane.f32.xlu0 %v2093
        %v2143 = vpop.xlane.xlu0 %2142
        %2144 = vadd.xlane.f32.xlu0 %v2094
        %v2145 = vpop.xlane.xlu0 %2144
        %2146 = vadd.xlane.f32.xlu0 %v2095
        %v2147 = vpop.xlane.xlu0 %2146
        %2148 = vadd.xlane.f32.xlu0 %v2096
        %v2149 = vpop.xlane.xlu0 %2148
        %2150 = vadd.xlane.f32.xlu0 %v2097
        %v2151 = vpop.xlane.xlu0 %2150
        %2152 = vadd.xlane.f32.xlu0 %v2098
        %v2153 = vpop.xlane.xlu0 %2152
        %2154 = vadd.xlane.f32.xlu0 %v2099
        %v2155 = vpop.xlane.xlu0 %2154
        %2156 = vadd.xlane.f32.xlu0 %v2100
        %v2157 = vpop.xlane.xlu0 %2156
        %2158 = vadd.xlane.f32.xlu0 %v2101
        %v2159 = vpop.xlane.xlu0 %2158
        %2160 = vadd.xlane.f32.xlu0 %v2102
        %v2161 = vpop.xlane.xlu0 %2160
        %2162 = vadd.xlane.f32.xlu0 %v2103
        %v2163 = vpop.xlane.xlu0 %2162
        %2164 = vadd.xlane.f32.xlu0 %v2104
        %v2165 = vpop.xlane.xlu0 %2164
        %2166 = vadd.xlane.f32.xlu0 %v2105
        %v2167 = vpop.xlane.xlu0 %2166
        %2168 = vadd.xlane.f32.xlu0 %v2106
        %v2169 = vpop.xlane.xlu0 %2168
        %2170 = vadd.xlane.f32.xlu0 %v2107
        %v2171 = vpop.xlane.xlu0 %2170
        %vm2172 = vcmask 31768
        %2173 = vst.msk [vmem:[%s337] sm:$0xff] %vm2172, %v2109
        %2174 = vst.msk [vmem:[%s337 + $0x8] sm:$0xff] %vm2172, %v2111
        %2175 = vst.msk [vmem:[%s337 + $0x10] sm:$0xff] %vm2172, %v2113
        %2176 = vst.msk [vmem:[%s337 + $0x18] sm:$0xff] %vm2172, %v2115
        %2177 = vst.msk [vmem:[%s337 + $0x20] sm:$0xff] %vm2172, %v2117
        %2178 = vst.msk [vmem:[%s337 + $0x28] sm:$0xff] %vm2172, %v2119
        %2179 = vst.msk [vmem:[%s337 + $0x30] sm:$0xff] %vm2172, %v2121
        %2180 = vst.msk [vmem:[%s337 + $0x38] sm:$0xff] %vm2172, %v2123
        %2181 = vst.msk [vmem:[%s337 + $0x40] sm:$0xff] %vm2172, %v2125
        %2182 = vst.msk [vmem:[%s337 + $0x48] sm:$0xff] %vm2172, %v2127
        %2183 = vst.msk [vmem:[%s337 + $0x50] sm:$0xff] %vm2172, %v2129
        %2184 = vst.msk [vmem:[%s337 + $0x58] sm:$0xff] %vm2172, %v2131
        %2185 = vst.msk [vmem:[%s337 + $0x60] sm:$0xff] %vm2172, %v2133
        %2186 = vst.msk [vmem:[%s337 + $0x68] sm:$0xff] %vm2172, %v2135
        %2187 = vst.msk [vmem:[%s337 + $0x70] sm:$0xff] %vm2172, %v2137
        %2188 = vst.msk [vmem:[%s337 + $0x78] sm:$0xff] %vm2172, %v2139
        %2189 = vst.msk [vmem:[%s337 + $0x80] sm:$0xff] %vm2172, %v2141
        %2190 = vst.msk [vmem:[%s337 + $0x88] sm:$0xff] %vm2172, %v2143
        %2191 = vst.msk [vmem:[%s337 + $0x90] sm:$0xff] %vm2172, %v2145
        %2192 = vst.msk [vmem:[%s337 + $0x98] sm:$0xff] %vm2172, %v2147
        %2193 = vst.msk [vmem:[%s337 + $0xa0] sm:$0xff] %vm2172, %v2149
        %2194 = vst.msk [vmem:[%s337 + $0xa8] sm:$0xff] %vm2172, %v2151
        %2195 = vst.msk [vmem:[%s337 + $0xb0] sm:$0xff] %vm2172, %v2153
        %2196 = vst.msk [vmem:[%s337 + $0xb8] sm:$0xff] %vm2172, %v2155
        %2197 = vst.msk [vmem:[%s337 + $0xc0] sm:$0xff] %vm2172, %v2157
        %2198 = vst.msk [vmem:[%s337 + $0xc8] sm:$0xff] %vm2172, %v2159
        %2199 = vst.msk [vmem:[%s337 + $0xd0] sm:$0xff] %vm2172, %v2161
        %2200 = vst.msk [vmem:[%s337 + $0xd8] sm:$0xff] %vm2172, %v2163
        %2201 = vst.msk [vmem:[%s337 + $0xe0] sm:$0xff] %vm2172, %v2165
        %2202 = vst.msk [vmem:[%s337 + $0xe8] sm:$0xff] %vm2172, %v2167
        %2203 = vst.msk [vmem:[%s337 + $0xf0] sm:$0xff] %vm2172, %v2169
        %2204 = vst.msk [vmem:[%s337 + $0xf8] sm:$0xff] %vm2172, %v2171
        %s2205 = smul.u32 32, %s22
        %p2206 = scmp.lt.s32.totalorder %s2205, 255
        %s2207 = scalar_select %p2206, %s2205, 255
        %s2208 = smul.addr %s2207, 8
        %s2209 = scalar_lea.vmem %s4, %s2208
        // Predicated region
        $region53: #{tpu_custom_call.1} parent=35 // pred_check
          %p2210 = pneg %p139
        $region54: #{tpu_custom_call.1} parent=35 // pred_check_branch
          %2212 = sbr.rel (%p2210) target = $region56
        $region55: #{tpu_custom_call.1} parent=35 // pred_region
          %s2213 = smul.u32 32, %s22
        $region56: #{tpu_custom_call.1} parent=35 // pred_fallthru
          _
      $region36: #{tpu_custom_call.1} parent=5 // pred_fallthru
        _
      %p2214 = scmp.le.s32.totalorder 2, %s17
      // Predicated region
      $region57: #{tpu_custom_call.1} parent=5 // pred_check
        %p2215 = pneg %p2214
      $region58: #{tpu_custom_call.1} parent=5 // pred_check_branch
        %2217 = sbr.rel (%p2215) target = $region60
      $region59: #{tpu_custom_call.1} parent=5 // pred_region
        %s2218 = ssub.s32 %s17, 2
        // Predicated region
        $region61: #{tpu_custom_call.1} parent=59 // pred_check
          %p2219 = pneg %p145
        $region62: #{tpu_custom_call.1} parent=59 // pred_check_branch
          %2221 = sbr.rel (%p2219) target = $region64
        $region63: #{tpu_custom_call.1} parent=59 // pred_region
          %s2222 = smul.u32 32, %s23
          %p2223 = scmp.lt.s32.totalorder %s2222, 255
          %s2224 = scalar_select %p2223, %s2222, 255
          %s2225 = smul.addr %s2224, 8
          %s2226 = scalar_lea.vmem %s4, %s2225
        $region64: #{tpu_custom_call.1} parent=59 // pred_fallthru
          _
      $region60: #{tpu_custom_call.1} parent=5 // pred_fallthru
        _
    $region6: #{tpu_custom_call.1} parent=1 // loop_footer
      %s21 = sadd.s32 1, %s17
    $region7: #{tpu_custom_call.1} parent=1 // loop_footer_branch
      %16 = sbr.rel target = $region3
    $region8: #{tpu_custom_call.1} parent=1 // loop_exit
      _
    %2227 = vsyncpa [#allocation3], 1
    %s2228 = scalar_lea.sflag [#allocation3], 1
    %2229 = vsyncpa %s2228, 1
    %2230 = vsyncpa [#allocation5], 1
    %s2231 = scalar_lea.sflag [#allocation5], 1
    %2232 = vsyncpa %s2231, 1
    %2233 = vsyncpa [#allocation8], 1
    %s2234 = scalar_lea.sflag [#allocation8], 1
    %2235 = vsyncpa %s2234, 1

</llo_original>
